<compile_context>
chip_gen: v5e
topology: v5e:2x2
jax: 0.10.0
libtpu: 0.0.40
codegen_flags: <defaults>
</compile_context>

<pallas_src>
import functools

import jax
import jax.numpy as jnp
from jax.experimental import pallas as pl
from jax.experimental.pallas import tpu as pltpu

BN_EPS = 1e-5


def _conv_stats_kernel(w_ref, x0_ref, x1_ref, mask_ref, conv_ref, stats_ref, *, offsets):
    # w_ref:    (K*K, Cout, Cin)   per-tap weights
    # x0_ref:   (Cin, TILE)        canvas tile j
    # x1_ref:   (Cin, TILE)        canvas tile j+1 (halo for shifted taps)
    # mask_ref: (1, TILE)          1.0 for real output pixels, 0.0 for padding/garbage
    # conv_ref: (Cout, TILE)       conv output tile (lane-dense)
    # stats_ref:(1, 2, Cout, 1)    per-tile [sum, sum_of_squares]
    cout, tile = conv_ref.shape

    xw = jnp.concatenate([x0_ref[...], x1_ref[...]], axis=1)  # (Cin, 2*TILE)

    acc = jnp.zeros((cout, tile), dtype=jnp.float32)
    for t, off in enumerate(offsets):  # static unroll over K*K taps
        acc = acc + jnp.dot(w_ref[t], xw[:, off:off + tile],
                            preferred_element_type=jnp.float32)

    conv_ref[...] = acc

    m = mask_ref[...]                     # (1, TILE), {0,1}
    am = acc * m                          # masked activations
    stats_ref[0, 0, :, :] = jnp.sum(am, axis=1, keepdims=True)        # sum(x)
    stats_ref[0, 1, :, :] = jnp.sum(am * acc, axis=1, keepdims=True)  # sum(x^2)


def _bn_relu_kernel(scale_ref, shift_ref, conv_ref, out_ref):
    # scale/shift: (Cout, 1);  conv/out: (Cout, TILE)
    y = conv_ref[...] * scale_ref[...] + shift_ref[...]
    out_ref[...] = jnp.maximum(y, 0.0)


def conv_m_forward(x_nchw, conv_w, conv_b, bn_gamma, bn_beta, padding, tile_m=512):
    """Conv2d(pad, stride 1) -> BatchNorm2d(training batch stats) -> ReLU.

    x_nchw: (N, Cin, H, W) f32.  Returns (N, Cout, Ho, Wo) f32 (PyTorch layout).
    """
    del conv_b  # per-channel conv bias is exactly cancelled by BN's mean subtraction

    N, Cin, H, W = x_nchw.shape
    Cout, _, K, _ = conv_w.shape
    Hp, Wp = H + 2 * padding, W + 2 * padding
    Ho, Wo = Hp - K + 1, Wp - K + 1

    # ---- glue: channel-major flat canvas (padded images stacked along H) ----
    xc = jnp.transpose(x_nchw, (1, 0, 2, 3)).astype(jnp.float32)          # (Cin,N,H,W)
    xc = jnp.pad(xc, ((0, 0), (0, 0), (padding, padding), (padding, padding)))
    L0 = N * Hp * Wp
    xf = xc.reshape(Cin, L0)

    n_tiles = -(-L0 // tile_m)
    m_pad = n_tiles * tile_m
    l_in = m_pad + tile_m                 # one extra zero tile = halo for shifted taps
    xf = jnp.pad(xf, ((0, 0), (0, l_in - L0)))

    # flat tap offsets (kh, kw) -> kh*Wp + kw ; must fit inside one tile of halo
    offsets = tuple(kh * Wp + kw for kh in range(K) for kw in range(K))
    assert offsets[-1] <= tile_m, "tile_m must be >= (K-1)*(Wp+1)"

    # per-tap weights, tap order matching `offsets`
    w_taps = jnp.transpose(conv_w, (2, 3, 0, 1)).reshape(K * K, Cout, Cin)
    w_taps = w_taps.astype(jnp.float32)

    # validity mask over the m_pad output columns (real output pixels only)
    p = jnp.arange(m_pad, dtype=jnp.int32)
    row, col = p // Wp, p % Wp
    valid = (row < N * Hp) & ((row % Hp) < Ho) & (col < Wo)
    mask = valid.astype(jnp.float32).reshape(1, m_pad)

    cparams = pltpu.CompilerParams(dimension_semantics=("parallel",))

    # ---- pass 1: conv (lane-dense (Cout, M)) + per-tile BN sum / sum-sq ----
    conv_flat, stats = pl.pallas_call(
        functools.partial(_conv_stats_kernel, offsets=offsets),
        grid=(n_tiles,),
        in_specs=[
            pl.BlockSpec((K * K, Cout, Cin), lambda j: (0, 0, 0)),
            pl.BlockSpec((Cin, tile_m), lambda j: (0, j)),        # tile j
            pl.BlockSpec((Cin, tile_m), lambda j: (0, j + 1)),    # halo: tile j+1
            pl.BlockSpec((1, tile_m), lambda j: (0, j)),
        ],
        out_specs=(
            pl.BlockSpec((Cout, tile_m), lambda j: (0, j)),
            pl.BlockSpec((1, 2, Cout, 1), lambda j: (j, 0, 0, 0)),
        ),
        out_shape=(
            jax.ShapeDtypeStruct((Cout, m_pad), jnp.float32),
            jax.ShapeDtypeStruct((n_tiles, 2, Cout, 1), jnp.float32),
        ),
        compiler_params=cparams,
    )(w_taps, xf, xf, mask)

    # ---- tiny per-channel stat reduction (Cout scalars) in plain JAX ----
    count = float(N * Ho * Wo)
    s1 = jnp.sum(stats[:, 0, :, 0], axis=0)               # (Cout,)
    s2 = jnp.sum(stats[:, 1, :, 0], axis=0)               # (Cout,)
    mean = s1 / count
    var = jnp.maximum(s2 / count - mean * mean, 0.0)       # biased var (BN training)
    scale = (bn_gamma.astype(jnp.float32) * jax.lax.rsqrt(var + BN_EPS)).reshape(Cout, 1)
    shift = bn_beta.astype(jnp.float32).reshape(Cout, 1) - mean.reshape(Cout, 1) * scale

    # ---- pass 2: fused normalize + affine + ReLU epilogue ----
    y_flat = pl.pallas_call(
        _bn_relu_kernel,
        grid=(n_tiles,),
        in_specs=[
            pl.BlockSpec((Cout, 1), lambda j: (0, 0)),
            pl.BlockSpec((Cout, 1), lambda j: (0, 0)),
            pl.BlockSpec((Cout, tile_m), lambda j: (0, j)),
        ],
        out_specs=pl.BlockSpec((Cout, tile_m), lambda j: (0, j)),
        out_shape=jax.ShapeDtypeStruct((Cout, m_pad), jnp.float32),
        compiler_params=cparams,
    )(scale, shift, conv_flat)

    # ---- glue: (Cout, canvas) -> NCHW, dropping padded/garbage positions ----
    y = y_flat[:, :L0].reshape(Cout, N, Hp, Wp)[:, :, :Ho, :Wo]
    return jnp.transpose(y, (1, 0, 2, 3))


def _reference(x_nchw, conv_w, conv_b, bn_gamma, bn_beta, padding):
    """Pure-JAX reference matching PyTorch Conv2d -> BatchNorm2d(train) -> ReLU."""
    y = jax.lax.conv_general_dilated(
        x_nchw, conv_w, window_strides=(1, 1),
        padding=[(padding, padding), (padding, padding)],
        dimension_numbers=("NCHW", "OIHW", "NCHW"))
    y = y + conv_b[None, :, None, None]
    mean = jnp.mean(y, axis=(0, 2, 3), keepdims=True)
    var = jnp.mean((y - mean) ** 2, axis=(0, 2, 3), keepdims=True)
    y = (y - mean) * jax.lax.rsqrt(var + BN_EPS)
    y = y * bn_gamma[None, :, None, None] + bn_beta[None, :, None, None]
    return jnp.maximum(y, 0.0)


if __name__ == "__main__":
    # Conv_m(feature_in=4, feature_out=8, K_size=3, Bias=True, Padding=1)
    feature_in, feature_out, K_size, padding = 4, 8, 3, 1
    N, H, W = 2, 16, 16

    key = jax.random.PRNGKey(0)
    k_x, k_w, k_b = jax.random.split(key, 3)

    x = jax.random.normal(k_x, (N, feature_in, H, W), dtype=jnp.float32)

    # deterministic parameter init (PyTorch-like scales; BN gamma=1, beta=0)
    fan_in = feature_in * K_size * K_size
    bound = 1.0 / (fan_in ** 0.5)
    conv_w = jax.random.uniform(k_w, (feature_out, feature_in, K_size, K_size),
                                minval=-bound, maxval=bound, dtype=jnp.float32)
    conv_b = jax.random.uniform(k_b, (feature_out,),
                                minval=-bound, maxval=bound, dtype=jnp.float32)
    bn_gamma = jnp.ones((feature_out,), dtype=jnp.float32)
    bn_beta = jnp.zeros((feature_out,), dtype=jnp.float32)

    out = conv_m_forward(x, conv_w, conv_b, bn_gamma, bn_beta, padding)
    out = jax.block_until_ready(out)

    ref = _reference(x, conv_w, conv_b, bn_gamma, bn_beta, padding)
    assert out.shape == (N, feature_out, H, W), out.shape
    err = float(jnp.max(jnp.abs(out - ref)))
    assert jnp.allclose(out, ref, atol=1e-4, rtol=1e-4), err

    print("KERNEL_OK")
</pallas_src>

<mosaic_0001>
module attributes {stable_mosaic.version = 11 : i64} {
  func.func @_conv_stats_kernel(%arg0: i32, %arg1: memref<9x8x4xf32, #tpu.memory_space<vmem>>, %arg2: memref<4x512xf32, #tpu.memory_space<vmem>>, %arg3: memref<4x512xf32, #tpu.memory_space<vmem>>, %arg4: memref<1x512xf32, #tpu.memory_space<vmem>>, %arg5: memref<8x512xf32, #tpu.memory_space<vmem>>, %arg6: memref<1x2x8x1xf32, #tpu.memory_space<vmem>>) attributes {dimension_semantics = [#tpu.dimension_semantics<parallel>], iteration_bounds = array<i64: 2>, scalar_prefetch = 0 : i64, scratch_operands = 0 : i64, tpu.core_type = #tpu.core_type<tc>, window_params = [{pipeline_mode = #tpu.pipeline_mode<synchronous>, transform_indices = @transform_0, window_bounds = array<i64: 9, 8, 4>}, {transform_indices = @transform_1, window_bounds = array<i64: 4, 512>}, {transform_indices = @transform_2, window_bounds = array<i64: 4, 512>}, {transform_indices = @transform_3, window_bounds = array<i64: 1, 512>}, {transform_indices = @transform_4, window_bounds = array<i64: 8, 512>}, {transform_indices = @transform_5, window_bounds = array<i64: 1, 2, 8, 1>}]} {
    %c0 = arith.constant 0 : index
    %c0_0 = arith.constant 0 : index
    %0 = vector.load %arg2[%c0, %c0_0] : memref<4x512xf32, #tpu.memory_space<vmem>>, vector<4x512xf32>
    %c0_1 = arith.constant 0 : index
    %c0_2 = arith.constant 0 : index
    %1 = vector.load %arg3[%c0_1, %c0_2] : memref<4x512xf32, #tpu.memory_space<vmem>>, vector<4x512xf32>
    %2 = tpu.concatenate %0, %1 in 1 : vector<4x512xf32>, vector<4x512xf32> -> vector<4x1024xf32>
    %cst = arith.constant 0.000000e+00 : f32
    %3 = vector.broadcast %cst : f32 to vector<8x512xf32>
    %c0_3 = arith.constant 0 : index
    %c0_4 = arith.constant 0 : index
    %c0_5 = arith.constant 0 : index
    %4 = vector.load %arg1[%c0_3, %c0_4, %c0_5] : memref<9x8x4xf32, #tpu.memory_space<vmem>>, vector<1x8x4xf32>
    %5 = vector.shape_cast %4 : vector<1x8x4xf32> to vector<8x4xf32>
    %6 = vector.extract_strided_slice %2 {offsets = [0, 0], sizes = [4, 512], strides = [1, 1]} : vector<4x1024xf32> to vector<4x512xf32>
    %cst_6 = arith.constant dense<0.000000e+00> : vector<8x512xf32>
    %7 = tpu.matmul %5, %6, %cst_6 {dimension_numbers = #tpu.dot_dimension_numbers<[1], [0], [0], [1], [0, 0, 1, 1], [], []>} : vector<8x4xf32>, vector<4x512xf32>, vector<8x512xf32> -> vector<8x512xf32>
    %8 = arith.addf %3, %7 : vector<8x512xf32>
    %c1 = arith.constant 1 : index
    %c0_7 = arith.constant 0 : index
    %c0_8 = arith.constant 0 : index
    %9 = vector.load %arg1[%c1, %c0_7, %c0_8] : memref<9x8x4xf32, #tpu.memory_space<vmem>>, vector<1x8x4xf32>
    %10 = vector.shape_cast %9 : vector<1x8x4xf32> to vector<8x4xf32>
    %11 = vector.extract_strided_slice %2 {offsets = [0, 1], sizes = [4, 512], strides = [1, 1]} : vector<4x1024xf32> to vector<4x512xf32>
    %cst_9 = arith.constant dense<0.000000e+00> : vector<8x512xf32>
    %12 = tpu.matmul %10, %11, %cst_9 {dimension_numbers = #tpu.dot_dimension_numbers<[1], [0], [0], [1], [0, 0, 1, 1], [], []>} : vector<8x4xf32>, vector<4x512xf32>, vector<8x512xf32> -> vector<8x512xf32>
    %13 = arith.addf %8, %12 : vector<8x512xf32>
    %c2 = arith.constant 2 : index
    %c0_10 = arith.constant 0 : index
    %c0_11 = arith.constant 0 : index
    %14 = vector.load %arg1[%c2, %c0_10, %c0_11] : memref<9x8x4xf32, #tpu.memory_space<vmem>>, vector<1x8x4xf32>
    %15 = vector.shape_cast %14 : vector<1x8x4xf32> to vector<8x4xf32>
    %16 = vector.extract_strided_slice %2 {offsets = [0, 2], sizes = [4, 512], strides = [1, 1]} : vector<4x1024xf32> to vector<4x512xf32>
    %cst_12 = arith.constant dense<0.000000e+00> : vector<8x512xf32>
    %17 = tpu.matmul %15, %16, %cst_12 {dimension_numbers = #tpu.dot_dimension_numbers<[1], [0], [0], [1], [0, 0, 1, 1], [], []>} : vector<8x4xf32>, vector<4x512xf32>, vector<8x512xf32> -> vector<8x512xf32>
    %18 = arith.addf %13, %17 : vector<8x512xf32>
    %c3 = arith.constant 3 : index
    %c0_13 = arith.constant 0 : index
    %c0_14 = arith.constant 0 : index
    %19 = vector.load %arg1[%c3, %c0_13, %c0_14] : memref<9x8x4xf32, #tpu.memory_space<vmem>>, vector<1x8x4xf32>
    %20 = vector.shape_cast %19 : vector<1x8x4xf32> to vector<8x4xf32>
    %21 = vector.extract_strided_slice %2 {offsets = [0, 18], sizes = [4, 512], strides = [1, 1]} : vector<4x1024xf32> to vector<4x512xf32>
    %cst_15 = arith.constant dense<0.000000e+00> : vector<8x512xf32>
    %22 = tpu.matmul %20, %21, %cst_15 {dimension_numbers = #tpu.dot_dimension_numbers<[1], [0], [0], [1], [0, 0, 1, 1], [], []>} : vector<8x4xf32>, vector<4x512xf32>, vector<8x512xf32> -> vector<8x512xf32>
    %23 = arith.addf %18, %22 : vector<8x512xf32>
    %c4 = arith.constant 4 : index
    %c0_16 = arith.constant 0 : index
    %c0_17 = arith.constant 0 : index
    %24 = vector.load %arg1[%c4, %c0_16, %c0_17] : memref<9x8x4xf32, #tpu.memory_space<vmem>>, vector<1x8x4xf32>
    %25 = vector.shape_cast %24 : vector<1x8x4xf32> to vector<8x4xf32>
    %26 = vector.extract_strided_slice %2 {offsets = [0, 19], sizes = [4, 512], strides = [1, 1]} : vector<4x1024xf32> to vector<4x512xf32>
    %cst_18 = arith.constant dense<0.000000e+00> : vector<8x512xf32>
    %27 = tpu.matmul %25, %26, %cst_18 {dimension_numbers = #tpu.dot_dimension_numbers<[1], [0], [0], [1], [0, 0, 1, 1], [], []>} : vector<8x4xf32>, vector<4x512xf32>, vector<8x512xf32> -> vector<8x512xf32>
    %28 = arith.addf %23, %27 : vector<8x512xf32>
    %c5 = arith.constant 5 : index
    %c0_19 = arith.constant 0 : index
    %c0_20 = arith.constant 0 : index
    %29 = vector.load %arg1[%c5, %c0_19, %c0_20] : memref<9x8x4xf32, #tpu.memory_space<vmem>>, vector<1x8x4xf32>
    %30 = vector.shape_cast %29 : vector<1x8x4xf32> to vector<8x4xf32>
    %31 = vector.extract_strided_slice %2 {offsets = [0, 20], sizes = [4, 512], strides = [1, 1]} : vector<4x1024xf32> to vector<4x512xf32>
    %cst_21 = arith.constant dense<0.000000e+00> : vector<8x512xf32>
    %32 = tpu.matmul %30, %31, %cst_21 {dimension_numbers = #tpu.dot_dimension_numbers<[1], [0], [0], [1], [0, 0, 1, 1], [], []>} : vector<8x4xf32>, vector<4x512xf32>, vector<8x512xf32> -> vector<8x512xf32>
    %33 = arith.addf %28, %32 : vector<8x512xf32>
    %c6 = arith.constant 6 : index
    %c0_22 = arith.constant 0 : index
    %c0_23 = arith.constant 0 : index
    %34 = vector.load %arg1[%c6, %c0_22, %c0_23] : memref<9x8x4xf32, #tpu.memory_space<vmem>>, vector<1x8x4xf32>
    %35 = vector.shape_cast %34 : vector<1x8x4xf32> to vector<8x4xf32>
    %36 = vector.extract_strided_slice %2 {offsets = [0, 36], sizes = [4, 512], strides = [1, 1]} : vector<4x1024xf32> to vector<4x512xf32>
    %cst_24 = arith.constant dense<0.000000e+00> : vector<8x512xf32>
    %37 = tpu.matmul %35, %36, %cst_24 {dimension_numbers = #tpu.dot_dimension_numbers<[1], [0], [0], [1], [0, 0, 1, 1], [], []>} : vector<8x4xf32>, vector<4x512xf32>, vector<8x512xf32> -> vector<8x512xf32>
    %38 = arith.addf %33, %37 : vector<8x512xf32>
    %c7 = arith.constant 7 : index
    %c0_25 = arith.constant 0 : index
    %c0_26 = arith.constant 0 : index
    %39 = vector.load %arg1[%c7, %c0_25, %c0_26] : memref<9x8x4xf32, #tpu.memory_space<vmem>>, vector<1x8x4xf32>
    %40 = vector.shape_cast %39 : vector<1x8x4xf32> to vector<8x4xf32>
    %41 = vector.extract_strided_slice %2 {offsets = [0, 37], sizes = [4, 512], strides = [1, 1]} : vector<4x1024xf32> to vector<4x512xf32>
    %cst_27 = arith.constant dense<0.000000e+00> : vector<8x512xf32>
    %42 = tpu.matmul %40, %41, %cst_27 {dimension_numbers = #tpu.dot_dimension_numbers<[1], [0], [0], [1], [0, 0, 1, 1], [], []>} : vector<8x4xf32>, vector<4x512xf32>, vector<8x512xf32> -> vector<8x512xf32>
    %43 = arith.addf %38, %42 : vector<8x512xf32>
    %c8 = arith.constant 8 : index
    %c0_28 = arith.constant 0 : index
    %c0_29 = arith.constant 0 : index
    %44 = vector.load %arg1[%c8, %c0_28, %c0_29] : memref<9x8x4xf32, #tpu.memory_space<vmem>>, vector<1x8x4xf32>
    %45 = vector.shape_cast %44 : vector<1x8x4xf32> to vector<8x4xf32>
    %46 = vector.extract_strided_slice %2 {offsets = [0, 38], sizes = [4, 512], strides = [1, 1]} : vector<4x1024xf32> to vector<4x512xf32>
    %cst_30 = arith.constant dense<0.000000e+00> : vector<8x512xf32>
    %47 = tpu.matmul %45, %46, %cst_30 {dimension_numbers = #tpu.dot_dimension_numbers<[1], [0], [0], [1], [0, 0, 1, 1], [], []>} : vector<8x4xf32>, vector<4x512xf32>, vector<8x512xf32> -> vector<8x512xf32>
    %48 = arith.addf %43, %47 : vector<8x512xf32>
    %c0_31 = arith.constant 0 : index
    %c0_32 = arith.constant 0 : index
    %49 = vector.load %arg5[%c0_31, %c0_32] : memref<8x512xf32, #tpu.memory_space<vmem>>, vector<8x512xf32>
    tpu.vector_store %arg5[%c0_31, %c0_32], %48 {strides = array<i32>} : memref<8x512xf32, #tpu.memory_space<vmem>>, vector<8x512xf32>,
    %c0_33 = arith.constant 0 : index
    %c0_34 = arith.constant 0 : index
    %50 = vector.load %arg4[%c0_33, %c0_34] : memref<1x512xf32, #tpu.memory_space<vmem>>, vector<1x512xf32>
    %51 = vector.broadcast %50 : vector<1x512xf32> to vector<8x512xf32>
    %52 = arith.mulf %48, %51 : vector<8x512xf32>
    %cst_35 = arith.constant dense<0.000000e+00> : vector<8xf32>
    %53 = vector.multi_reduction <add>, %52, %cst_35 [1] : vector<8x512xf32> to vector<8xf32>
    %54 = vector.shape_cast %53 : vector<8xf32> to vector<8x1xf32>
    %c0_36 = arith.constant 0 : index
    %c0_37 = arith.constant 0 : index
    %c0_38 = arith.constant 0 : index
    %c0_39 = arith.constant 0 : index
    %55 = vector.load %arg6[%c0_36, %c0_37, %c0_38, %c0_39] : memref<1x2x8x1xf32, #tpu.memory_space<vmem>>, vector<1x1x8x1xf32>
    %56 = vector.shape_cast %55 : vector<1x1x8x1xf32> to vector<8x1xf32>
    %57 = vector.shape_cast %54 : vector<8x1xf32> to vector<1x1x8x1xf32>
    tpu.vector_store %arg6[%c0_36, %c0_37, %c0_38, %c0_39], %57 {strides = array<i32>} : memref<1x2x8x1xf32, #tpu.memory_space<vmem>>, vector<1x1x8x1xf32>,
    %58 = arith.mulf %52, %48 : vector<8x512xf32>
    %cst_40 = arith.constant dense<0.000000e+00> : vector<8xf32>
    %59 = vector.multi_reduction <add>, %58, %cst_40 [1] : vector<8x512xf32> to vector<8xf32>
    %60 = vector.shape_cast %59 : vector<8xf32> to vector<8x1xf32>
    %c0_41 = arith.constant 0 : index
    %c1_42 = arith.constant 1 : index
    %c0_43 = arith.constant 0 : index
    %c0_44 = arith.constant 0 : index
    %61 = vector.load %arg6[%c0_41, %c1_42, %c0_43, %c0_44] : memref<1x2x8x1xf32, #tpu.memory_space<vmem>>, vector<1x1x8x1xf32>
    %62 = vector.shape_cast %61 : vector<1x1x8x1xf32> to vector<8x1xf32>
    %63 = vector.shape_cast %60 : vector<8x1xf32> to vector<1x1x8x1xf32>
    tpu.vector_store %arg6[%c0_41, %c1_42, %c0_43, %c0_44], %63 {strides = array<i32>} : memref<1x2x8x1xf32, #tpu.memory_space<vmem>>, vector<1x1x8x1xf32>,
    return
  }
  func.func @transform_0(%arg0: i32) -> (i32, i32, i32) {
    %c0_i32 = arith.constant 0 : i32
    %c0_i32_0 = arith.constant 0 : i32
    %c0_i32_1 = arith.constant 0 : i32
    %c0_i32_2 = arith.constant 0 : i32
    return %c0_i32, %c0_i32_0, %c0_i32_1 : i32, i32, i32
  }
  func.func @transform_1(%arg0: i32) -> (i32, i32) {
    %c0_i32 = arith.constant 0 : i32
    %c0_i32_0 = arith.constant 0 : i32
    return %c0_i32, %arg0 : i32, i32
  }
  func.func @transform_2(%arg0: i32) -> (i32, i32) {
    %c1_i32 = arith.constant 1 : i32
    %0 = arith.addi %arg0, %c1_i32 : i32
    %c0_i32 = arith.constant 0 : i32
    %c0_i32_0 = arith.constant 0 : i32
    return %c0_i32, %0 : i32, i32
  }
  func.func @transform_3(%arg0: i32) -> (i32, i32) {
    %c0_i32 = arith.constant 0 : i32
    %c0_i32_0 = arith.constant 0 : i32
    return %c0_i32, %arg0 : i32, i32
  }
  func.func @transform_4(%arg0: i32) -> (i32, i32) {
    %c0_i32 = arith.constant 0 : i32
    %c0_i32_0 = arith.constant 0 : i32
    return %c0_i32, %arg0 : i32, i32
  }
  func.func @transform_5(%arg0: i32) -> (i32, i32, i32, i32) {
    %c0_i32 = arith.constant 0 : i32
    %c0_i32_0 = arith.constant 0 : i32
    %c0_i32_1 = arith.constant 0 : i32
    %c0_i32_2 = arith.constant 0 : i32
    return %arg0, %c0_i32, %c0_i32_0, %c0_i32_1 : i32, i32, i32, i32
  }
}

</mosaic_0001>

<llo_original>
// kernel: tpu_custom_call.1
$region0: #{tpu_custom_call.1}
  #allocation0 [shape = 'u32[]', space=smem, size = 0x4, offset = 0x4, fixed_abs, tag = 'smem constant byte address 0x4 - core index']
  #allocation1 [shape = 'u32[72,128]{1,0:T(1,128)}', space=vmem, size = 0x9000, scoped, tag = 'internal scratch']
  %s0 = inlined_call_operand.vmem [shape: f32[9,8,4], index: 0, kind: input, shape index: {}]
  %s1 = inlined_call_operand.vmem [shape: f32[4,1536], index: 1, kind: input, shape index: {}]
  %s2 = inlined_call_operand.vmem [shape: f32[4,1536], index: 2, kind: input, shape index: {}]
  %s3 = inlined_call_operand.vmem [shape: f32[1,1024], index: 3, kind: input, shape index: {}]
  %s4 = inlined_call_operand.hbm [shape: f32[8,1024], index: 4, kind: output, shape index: {0}]
  %s5 = inlined_call_operand.vmem [shape: f32[2,2,8,1], index: 5, kind: output, shape index: {1}]
  %6 = xla_tuple %s4, %s5
  %s7 = sld [smem:[#allocation0]]
  $region57: #{tpu_custom_call.1} parent=0
    _
  %s9 = ssub.s32 1, %s7
  %s10 = scalar_select 0, %s9, %s7
  $region1: #{tpu_custom_call.1} parent=0
    #allocation2 [shape = 'u8[32768]{0}', space=vmem, size = 0x8000, scoped, tag = 'output window, operand 0']
    #allocation3 [shape = 's32[2]{0}', space=sflag, size = 0x8, scoped, tag = 'scoped memory for tpu_custom_call.1']
    %11 = vsyncpa [#allocation3], 0
    %s12 = scalar_lea.sflag [#allocation3], 1
    %13 = vsyncpa %s12, 0
    loop: start=0, step=1, limit=4
    $region2: #{tpu_custom_call.1} parent=1 // loop_pre_header
      _
    $region3: #{tpu_custom_call.1} parent=1 // loop_header
      %s15 = sphi 0, %s19
      %p16 = scmp.ge.s32.totalorder %s15, 4
      %s23 = sphi 0, %s23
      %s25 = sphi 0, %s23
      %s26 = sphi 0, %s25
      %s40 = sphi 0, %s26
      %s46 = sphi 0, %s48
      %s49 = sphi 0, %s46
      %s50 = sphi 0, %s49
      %s66 = sphi 0, %s50
      %s74 = sphi 0, %s76
      %s77 = sphi 0, %s74
      %s78 = sphi 0, %s77
      %s94 = sphi 0, %s78
      %s100 = sphi 0, %s102
      %s103 = sphi 0, %s100
      %s104 = sphi 0, %s103
      %s120 = sphi 0, %s104
      %s126 = sphi 0, %s128
      %s129 = sphi 0, %s126
      %s130 = sphi 0, %s129
      %s146 = sphi 0, %s130
      %s152 = sphi 0, %s154
      %s155 = sphi 0, %s152
      %s156 = sphi 0, %s155
      %s172 = sphi 0, %s156
    $region4: #{tpu_custom_call.1} parent=1 // loop_header_branch
      %18 = sbr.rel (%p16) target = $region8
    $region5: #{tpu_custom_call.1} parent=1 // loop_body
      %s20 = ssub.s32 %s15, 1
      %s21 = ssub.s32 %s15, 2
      %s22 = sadd.s32 %s15, 1
      %s24 = sadd.s32 %s23, 1
      %p27 = scmp.eq.s32.totalorder %s15, 1
      %p28 = scmp.ne.s32.totalorder %s23, %s25
      %p29 = scmp.eq.s32.totalorder %s15, 0
      %p30 = por %p28, %p29
      %p31 = scmp.ne.s32.totalorder %s23, %s25
      %p32 = scmp.eq.s32.totalorder %s20, 1
      %p33 = por %p31, %p32
      %p34 = scmp.ne.s32.totalorder %s25, %s26
      %p35 = scmp.eq.s32.totalorder %s20, 0
      %p36 = por %p34, %p35
      %p37 = scmp.ne.s32.totalorder %s25, %s26
      %p38 = scmp.eq.s32.totalorder %s21, 1
      %p39 = por %p37, %p38
      %p41 = scmp.ne.s32.totalorder %s26, %s40
      %p42 = scmp.eq.s32.totalorder %s21, 0
      %p43 = por %p41, %p42
      %s44 = ssub.s32 %s15, %s22
      %p45 = scmp.eq.s32.totalorder %s44, 0
      %s47 = sadd.s32 %s46, 1
      %s48 = scalar_select %p45, %s46, %s47
      %p51 = pneg %p45
      %p52 = scmp.eq.s32.totalorder %s15, 1
      %p53 = por %p51, %p52
      %p54 = scmp.ne.s32.totalorder %s46, %s49
      %p55 = scmp.eq.s32.totalorder %s15, 0
      %p56 = por %p54, %p55
      %p57 = scmp.ne.s32.totalorder %s46, %s49
      %p58 = scmp.eq.s32.totalorder %s20, 1
      %p59 = por %p57, %p58
      %p60 = scmp.ne.s32.totalorder %s49, %s50
      %p61 = scmp.eq.s32.totalorder %s20, 0
      %p62 = por %p60, %p61
      %p63 = scmp.ne.s32.totalorder %s49, %s50
      %p64 = scmp.eq.s32.totalorder %s21, 1
      %p65 = por %p63, %p64
      %p67 = scmp.ne.s32.totalorder %s50, %s66
      %p68 = scmp.eq.s32.totalorder %s21, 0
      %p69 = por %p67, %p68
      %s70 = sadd.s32 %s15, 1
      %s71 = sadd.s32 %s22, 1
      %s72 = ssub.s32 %s70, %s71
      %p73 = scmp.eq.s32.totalorder %s72, 0
      %s75 = sadd.s32 %s74, 1
      %s76 = scalar_select %p73, %s74, %s75
      %p79 = pneg %p73
      %p80 = scmp.eq.s32.totalorder %s15, 1
      %p81 = por %p79, %p80
      %p82 = scmp.ne.s32.totalorder %s74, %s77
      %p83 = scmp.eq.s32.totalorder %s15, 0
      %p84 = por %p82, %p83
      %p85 = scmp.ne.s32.totalorder %s74, %s77
      %p86 = scmp.eq.s32.totalorder %s20, 1
      %p87 = por %p85, %p86
      %p88 = scmp.ne.s32.totalorder %s77, %s78
      %p89 = scmp.eq.s32.totalorder %s20, 0
      %p90 = por %p88, %p89
      %p91 = scmp.ne.s32.totalorder %s77, %s78
      %p92 = scmp.eq.s32.totalorder %s21, 1
      %p93 = por %p91, %p92
      %p95 = scmp.ne.s32.totalorder %s78, %s94
      %p96 = scmp.eq.s32.totalorder %s21, 0
      %p97 = por %p95, %p96
      %s98 = ssub.s32 %s15, %s22
      %p99 = scmp.eq.s32.totalorder %s98, 0
      %s101 = sadd.s32 %s100, 1
      %s102 = scalar_select %p99, %s100, %s101
      %p105 = pneg %p99
      %p106 = scmp.eq.s32.totalorder %s15, 1
      %p107 = por %p105, %p106
      %p108 = scmp.ne.s32.totalorder %s100, %s103
      %p109 = scmp.eq.s32.totalorder %s15, 0
      %p110 = por %p108, %p109
      %p111 = scmp.ne.s32.totalorder %s100, %s103
      %p112 = scmp.eq.s32.totalorder %s20, 1
      %p113 = por %p111, %p112
      %p114 = scmp.ne.s32.totalorder %s103, %s104
      %p115 = scmp.eq.s32.totalorder %s20, 0
      %p116 = por %p114, %p115
      %p117 = scmp.ne.s32.totalorder %s103, %s104
      %p118 = scmp.eq.s32.totalorder %s21, 1
      %p119 = por %p117, %p118
      %p121 = scmp.ne.s32.totalorder %s104, %s120
      %p122 = scmp.eq.s32.totalorder %s21, 0
      %p123 = por %p121, %p122
      %s124 = ssub.s32 %s15, %s22
      %p125 = scmp.eq.s32.totalorder %s124, 0
      %s127 = sadd.s32 %s126, 1
      %s128 = scalar_select %p125, %s126, %s127
      %p131 = pneg %p125
      %p132 = scmp.eq.s32.totalorder %s15, 1
      %p133 = por %p131, %p132
      %p134 = scmp.ne.s32.totalorder %s126, %s129
      %p135 = scmp.eq.s32.totalorder %s15, 0
      %p136 = por %p134, %p135
      %p137 = scmp.ne.s32.totalorder %s126, %s129
      %p138 = scmp.eq.s32.totalorder %s20, 1
      %p139 = por %p137, %p138
      %p140 = scmp.ne.s32.totalorder %s129, %s130
      %p141 = scmp.eq.s32.totalorder %s20, 0
      %p142 = por %p140, %p141
      %p143 = scmp.ne.s32.totalorder %s129, %s130
      %p144 = scmp.eq.s32.totalorder %s21, 1
      %p145 = por %p143, %p144
      %p147 = scmp.ne.s32.totalorder %s130, %s146
      %p148 = scmp.eq.s32.totalorder %s21, 0
      %p149 = por %p147, %p148
      %s150 = ssub.s32 %s15, %s22
      %p151 = scmp.eq.s32.totalorder %s150, 0
      %s153 = sadd.s32 %s152, 1
      %s154 = scalar_select %p151, %s152, %s153
      %p157 = pneg %p151
      %p158 = scmp.eq.s32.totalorder %s15, 1
      %p159 = por %p157, %p158
      %p160 = scmp.ne.s32.totalorder %s152, %s155
      %p161 = scmp.eq.s32.totalorder %s15, 0
      %p162 = por %p160, %p161
      %p163 = scmp.ne.s32.totalorder %s152, %s155
      %p164 = scmp.eq.s32.totalorder %s20, 1
      %p165 = por %p163, %p164
      %p166 = scmp.ne.s32.totalorder %s155, %s156
      %p167 = scmp.eq.s32.totalorder %s20, 0
      %p168 = por %p166, %p167
      %p169 = scmp.ne.s32.totalorder %s155, %s156
      %p170 = scmp.eq.s32.totalorder %s21, 1
      %p171 = por %p169, %p170
      %p173 = scmp.ne.s32.totalorder %s156, %s172
      %p174 = scmp.eq.s32.totalorder %s21, 0
      %p175 = por %p173, %p174
      %p176 = scmp.le.s32.totalorder 1, %s15
      %p177 = scmp.lt.s32.totalorder %s15, 3
      %p178 = pnand %p176, %p177
      %p179 = pneg %p178
      // Predicated region
      $region9: #{tpu_custom_call.1} parent=5 // pred_check
        _
      $region10: #{tpu_custom_call.1} parent=5 // pred_check_branch
        %181 = sbr.rel (%p178) target = $region12
      $region11: #{tpu_custom_call.1} parent=5 // pred_region
        %s182 = ssub.s32 %s15, 1
        // Predicated region
        $region13: #{tpu_custom_call.1} parent=11 // pred_check
          %p183 = pneg %p36
        $region14: #{tpu_custom_call.1} parent=11 // pred_check_branch
          %185 = sbr.rel (%p183) target = $region16
        $region15: #{tpu_custom_call.1} parent=11 // pred_region
          _
        $region16: #{tpu_custom_call.1} parent=11 // pred_fallthru
          _
      $region12: #{tpu_custom_call.1} parent=5 // pred_fallthru
        _
      %p186 = scmp.lt.s32.totalorder %s15, 2
      // Predicated region
      $region17: #{tpu_custom_call.1} parent=5 // pred_check
        %p187 = pneg %p186
      $region18: #{tpu_custom_call.1} parent=5 // pred_check_branch
        %189 = sbr.rel (%p187) target = $region20
      $region19: #{tpu_custom_call.1} parent=5 // pred_region
        // Predicated region
        $region21: #{tpu_custom_call.1} parent=19 // pred_check
          %p190 = pneg %p56
        $region22: #{tpu_custom_call.1} parent=19 // pred_check_branch
          %192 = sbr.rel (%p190) target = $region24
        $region23: #{tpu_custom_call.1} parent=19 // pred_region
          %s193 = smul.u32 4, %s15
          %p194 = scmp.lt.s32.totalorder %s193, 11
          %s195 = scalar_select %p194, %s193, 11
          %s196 = smul.addr %s195, 4
          %s197 = scalar_lea.vmem %s1, %s196
          %s198 = smul.u32 4, %s15
        $region24: #{tpu_custom_call.1} parent=19 // pred_fallthru
          _
        // Predicated region
        $region25: #{tpu_custom_call.1} parent=19 // pred_check
          %p199 = pneg %p84
        $region26: #{tpu_custom_call.1} parent=19 // pred_check_branch
          %201 = sbr.rel (%p199) target = $region28
        $region27: #{tpu_custom_call.1} parent=19 // pred_region
          %s202 = sadd.s32 %s15, 1
          %s203 = smul.u32 4, %s202
          %p204 = scmp.lt.s32.totalorder %s203, 11
          %s205 = scalar_select %p204, %s203, 11
          %s206 = smul.addr %s205, 4
          %s207 = scalar_lea.vmem %s2, %s206
          %s208 = sadd.s32 %s15, 1
          %s209 = smul.u32 4, %s208
        $region28: #{tpu_custom_call.1} parent=19 // pred_fallthru
          _
        // Predicated region
        $region29: #{tpu_custom_call.1} parent=19 // pred_check
          %p210 = pneg %p110
        $region30: #{tpu_custom_call.1} parent=19 // pred_check_branch
          %212 = sbr.rel (%p210) target = $region32
        $region31: #{tpu_custom_call.1} parent=19 // pred_region
          %s213 = smul.u32 4, %s15
          %p214 = scmp.lt.s32.totalorder %s213, 7
          %s215 = scalar_select %p214, %s213, 7
          %s216 = scalar_lea.vmem %s3, %s215
          %s217 = smul.u32 4, %s15
        $region32: #{tpu_custom_call.1} parent=19 // pred_fallthru
          _
      $region20: #{tpu_custom_call.1} parent=5 // pred_fallthru
        _
      %p218 = scmp.le.s32.totalorder 1, %s15
      %p219 = scmp.lt.s32.totalorder %s15, 3
      %p220 = pnand %p218, %p219
      %p221 = pneg %p220
      // Predicated region
      $region33: #{tpu_custom_call.1} parent=5 // pred_check
        _
      $region34: #{tpu_custom_call.1} parent=5 // pred_check_branch
        %223 = sbr.rel (%p220) target = $region36
      $region35: #{tpu_custom_call.1} parent=5 // pred_region
        %s224 = ssub.s32 %s15, 1
        %p225 = pneg %p36
        %p226 = pneg %p33
        %s227 = smul.u32 4, %s20
        %p228 = scmp.lt.s32.totalorder %s227, 11
        %s229 = scalar_select %p228, %s227, 11
        %s230 = smul.addr %s229, 4
        %s231 = scalar_lea.vmem %s1, %s230
        %p232 = pneg %p62
        %p233 = pneg %p59
        %s234 = sadd.s32 %s20, 1
        %s235 = smul.u32 4, %s234
        %p236 = scmp.lt.s32.totalorder %s235, 11
        %s237 = scalar_select %p236, %s235, 11
        %s238 = smul.addr %s237, 4
        %s239 = scalar_lea.vmem %s2, %s238
        %p240 = pneg %p90
        %p241 = pneg %p87
        %s242 = smul.u32 4, %s20
        %p243 = scmp.lt.s32.totalorder %s242, 7
        %s244 = scalar_select %p243, %s242, 7
        %s245 = scalar_lea.vmem %s3, %s244
        %p246 = pneg %p116
        %p247 = pneg %p113
        %p248 = pneg %p142
        %p249 = pneg %p139
        %s250 = sand.u32 %s129, 1
        %s251 = scalar_lea.sflag [#allocation3], %s250
        %s252 = sand.u32 %s129, 1
        %s253 = smul.addr %s252, 32
        %s254 = scalar_lea.vmem [#allocation2], %s253
        %p255 = pneg %p168
        %p256 = pneg %p165
        %p257 = scmp.lt.s32.totalorder %s20, 1
        %s258 = scalar_select %p257, %s20, 1
        %s259 = smul.addr %s258, 2
        %s260 = smul.addr %s259, 8
        %s261 = scalar_lea.vmem %s5, %s260
        %s262 = smul.u32 4, %s20
        %p263 = scmp.lt.s32.totalorder %s262, 11
        %s264 = scalar_select %p263, %s262, 11
        %s265 = smul.addr %s264, 4
        %s266 = scalar_lea.vmem %s1, %s265
        %s267 = smul.u32 4, %s20
        %s268 = sadd.s32 %s20, 1
        %s269 = smul.u32 4, %s268
        %p270 = scmp.lt.s32.totalorder %s269, 11
        %s271 = scalar_select %p270, %s269, 11
        %s272 = smul.addr %s271, 4
        %s273 = scalar_lea.vmem %s2, %s272
        %s274 = sadd.s32 %s20, 1
        %s275 = smul.u32 4, %s274
        %s276 = smul.u32 4, %s20
        %p277 = scmp.lt.s32.totalorder %s276, 7
        %s278 = scalar_select %p277, %s276, 7
        %s279 = scalar_lea.vmem %s3, %s278
        %s280 = smul.u32 4, %s20
        %s281 = smul.u32 4, %s20
        %p282 = scmp.lt.s32.totalorder %s20, 1
        %s283 = scalar_select %p282, %s20, 1
        %s284 = smul.addr %s283, 2
        %s285 = smul.addr %s284, 8
        %s286 = scalar_lea.vmem %s5, %s285
        %v287 = vld [vmem:[%s266] sm:$0xff]
        %v288 = vld [vmem:[%s266 + $0x8] sm:$0xff]
        %v289 = vld [vmem:[%s273] sm:$0xff]
        %v290 = vld [vmem:[%s273 + $0x8] sm:$0xff]
        %293 = vst [vmem:[#allocation1] ss:$2 sm:$0xff] %v287
        %s294 = scalar_lea.vmem [#allocation1], 16
        %295 = vst [vmem:[%s294] ss:$2 sm:$0xff] %v288
        %v296 = vld.sshfl [vmem:[#allocation1] sm:$0xff pattern:$0x75316420]
        %v297 = vld.sshfl [vmem:[#allocation1 + $0x8] sm:$0xff pattern:$0x75316420]
        %v298 = vld.sshfl [vmem:[#allocation1 + $0x10] sm:$0xff pattern:$0x75316420]
        %v299 = vld.sshfl [vmem:[#allocation1 + $0x18] sm:$0xff pattern:$0x75316420]
        %302 = vst [vmem:[#allocation1] ss:$2 sm:$0xff] %v289
        %s303 = scalar_lea.vmem [#allocation1], 16
        %304 = vst [vmem:[%s303] ss:$2 sm:$0xff] %v290
        %v305 = vld.sshfl [vmem:[#allocation1] sm:$0xff pattern:$0x75316420]
        %v306 = vld [vmem:[%s0] sm:$0xff]
        %s307 = scalar_lea.vmem %s0, 8
        %v308 = vld [vmem:[%s307] sm:$0xff]
        %309 = vrot.lane.b32.xlu0 %v296, 127
        %v310 = vpop.permute.xlu0 %309
        %311 = vrot.lane.b32.xlu0 %v297, 127
        %v312 = vpop.permute.xlu0 %311
        %313 = vrot.lane.b32.xlu0 %v298, 127
        %v314 = vpop.permute.xlu0 %313
        %315 = vrot.lane.b32.xlu0 %v299, 127
        %v316 = vpop.permute.xlu0 %315
        %317 = vrot.lane.b32.xlu0 %v305, 127
        %v318 = vpop.permute.xlu0 %317
        %vm319 = vcmask 1039360
        %v320 = vsel %vm319, %v310, %v312
        %v321 = vsel %vm319, %v312, %v314
        %v322 = vsel %vm319, %v314, %v316
        %v323 = vsel %vm319, %v316, %v318
        %vm324 = vcmask 31744
        %v326 = vsel %vm324, %v308, 0
        %vm328 = vcmask 1043456
        %v329 = vsel %vm328, %v320, 0
        %v331 = vsel %vm328, %v321, 0
        %v333 = vsel %vm328, %v322, 0
        %v335 = vsel %vm328, %v323, 0
        %337 = vmatpush.msra.mxu0 0.0
        %338 = vmatpush.msra.mxu0 0.0
        %339 = vmatpush.msra.mxu0 0.0
        %340 = vmatpush.msra.mxu0 0.0
        %341 = vmatpush.msra.mxu0 0.0
        %342 = vmatpush.msra.mxu0 0.0
        %343 = vmatpush.msra.mxu0 0.0
        %344 = vmatpush.msra.mxu0 0.0
        %345 = vmatpush.msra.mxu0 0.0
        %346 = vmatpush.msra.mxu0 0.0
        %347 = vmatpush.msra.mxu0 0.0
        %348 = vmatpush.msra.mxu0 0.0
        %349 = vmatpush.msra.mxu0 0.0
        %350 = vmatpush.msra.mxu0 0.0
        %351 = vmatpush.msra.mxu0 0.0
        %352 = vmatpush.msra.mxu0 %v329
        %353 = vmatmul.f32.gmra.mxu0 %v326
        %v354 = vpop.f32.mrf.mxu0
        %v355 = vadd.f32 0.0, %v354
        %356 = vdwg.mxu0
        %357 = vmatpush.msra.mxu0 0.0
        %358 = vmatpush.msra.mxu0 0.0
        %359 = vmatpush.msra.mxu0 0.0
        %360 = vmatpush.msra.mxu0 0.0
        %361 = vmatpush.msra.mxu0 0.0
        %362 = vmatpush.msra.mxu0 0.0
        %363 = vmatpush.msra.mxu0 0.0
        %364 = vmatpush.msra.mxu0 0.0
        %365 = vmatpush.msra.mxu0 0.0
        %366 = vmatpush.msra.mxu0 0.0
        %367 = vmatpush.msra.mxu0 0.0
        %368 = vmatpush.msra.mxu0 0.0
        %369 = vmatpush.msra.mxu0 0.0
        %370 = vmatpush.msra.mxu0 0.0
        %371 = vmatpush.msra.mxu0 0.0
        %372 = vmatpush.msra.mxu0 %v331
        %373 = vmatmul.f32.gmra.mxu0 %v326
        %v374 = vpop.f32.mrf.mxu0
        %v375 = vadd.f32 0.0, %v374
        %376 = vdwg.mxu0
        %377 = vmatpush.msra.mxu0 0.0
        %378 = vmatpush.msra.mxu0 0.0
        %379 = vmatpush.msra.mxu0 0.0
        %380 = vmatpush.msra.mxu0 0.0
        %381 = vmatpush.msra.mxu0 0.0
        %382 = vmatpush.msra.mxu0 0.0
        %383 = vmatpush.msra.mxu0 0.0
        %384 = vmatpush.msra.mxu0 0.0
        %385 = vmatpush.msra.mxu0 0.0
        %386 = vmatpush.msra.mxu0 0.0
        %387 = vmatpush.msra.mxu0 0.0
        %388 = vmatpush.msra.mxu0 0.0
        %389 = vmatpush.msra.mxu0 0.0
        %390 = vmatpush.msra.mxu0 0.0
        %391 = vmatpush.msra.mxu0 0.0
        %392 = vmatpush.msra.mxu0 %v333
        %393 = vmatmul.f32.gmra.mxu0 %v326
        %v394 = vpop.f32.mrf.mxu0
        %v395 = vadd.f32 0.0, %v394
        %396 = vdwg.mxu0
        %397 = vmatpush.msra.mxu0 0.0
        %398 = vmatpush.msra.mxu0 0.0
        %399 = vmatpush.msra.mxu0 0.0
        %400 = vmatpush.msra.mxu0 0.0
        %401 = vmatpush.msra.mxu0 0.0
        %402 = vmatpush.msra.mxu0 0.0
        %403 = vmatpush.msra.mxu0 0.0
        %404 = vmatpush.msra.mxu0 0.0
        %405 = vmatpush.msra.mxu0 0.0
        %406 = vmatpush.msra.mxu0 0.0
        %407 = vmatpush.msra.mxu0 0.0
        %408 = vmatpush.msra.mxu0 0.0
        %409 = vmatpush.msra.mxu0 0.0
        %410 = vmatpush.msra.mxu0 0.0
        %411 = vmatpush.msra.mxu0 0.0
        %412 = vmatpush.msra.mxu0 %v335
        %413 = vmatmul.f32.gmra.mxu0 %v326
        %v414 = vpop.f32.mrf.mxu0
        %v415 = vadd.f32 0.0, %v414
        %416 = vdwg.mxu0
        %v418 = vsel %vm324, %v306, 0
        %v420 = vsel %vm328, %v296, 0
        %v422 = vsel %vm328, %v297, 0
        %v424 = vsel %vm328, %v298, 0
        %v426 = vsel %vm328, %v299, 0
        %428 = vmatpush.msra.mxu0 0.0
        %429 = vmatpush.msra.mxu0 0.0
        %430 = vmatpush.msra.mxu0 0.0
        %431 = vmatpush.msra.mxu0 0.0
        %432 = vmatpush.msra.mxu0 0.0
        %433 = vmatpush.msra.mxu0 0.0
        %434 = vmatpush.msra.mxu0 0.0
        %435 = vmatpush.msra.mxu0 0.0
        %436 = vmatpush.msra.mxu0 0.0
        %437 = vmatpush.msra.mxu0 0.0
        %438 = vmatpush.msra.mxu0 0.0
        %439 = vmatpush.msra.mxu0 0.0
        %440 = vmatpush.msra.mxu0 0.0
        %441 = vmatpush.msra.mxu0 0.0
        %442 = vmatpush.msra.mxu0 0.0
        %443 = vmatpush.msra.mxu0 %v420
        %444 = vmatmul.f32.gmra.mxu0 %v418
        %v445 = vpop.f32.mrf.mxu0
        %v446 = vadd.f32 %v355, %v445
        %447 = vdwg.mxu0
        %448 = vmatpush.msra.mxu0 0.0
        %449 = vmatpush.msra.mxu0 0.0
        %450 = vmatpush.msra.mxu0 0.0
        %451 = vmatpush.msra.mxu0 0.0
        %452 = vmatpush.msra.mxu0 0.0
        %453 = vmatpush.msra.mxu0 0.0
        %454 = vmatpush.msra.mxu0 0.0
        %455 = vmatpush.msra.mxu0 0.0
        %456 = vmatpush.msra.mxu0 0.0
        %457 = vmatpush.msra.mxu0 0.0
        %458 = vmatpush.msra.mxu0 0.0
        %459 = vmatpush.msra.mxu0 0.0
        %460 = vmatpush.msra.mxu0 0.0
        %461 = vmatpush.msra.mxu0 0.0
        %462 = vmatpush.msra.mxu0 0.0
        %463 = vmatpush.msra.mxu0 %v422
        %464 = vmatmul.f32.gmra.mxu0 %v418
        %v465 = vpop.f32.mrf.mxu0
        %v466 = vadd.f32 %v375, %v465
        %467 = vdwg.mxu0
        %468 = vmatpush.msra.mxu0 0.0
        %469 = vmatpush.msra.mxu0 0.0
        %470 = vmatpush.msra.mxu0 0.0
        %471 = vmatpush.msra.mxu0 0.0
        %472 = vmatpush.msra.mxu0 0.0
        %473 = vmatpush.msra.mxu0 0.0
        %474 = vmatpush.msra.mxu0 0.0
        %475 = vmatpush.msra.mxu0 0.0
        %476 = vmatpush.msra.mxu0 0.0
        %477 = vmatpush.msra.mxu0 0.0
        %478 = vmatpush.msra.mxu0 0.0
        %479 = vmatpush.msra.mxu0 0.0
        %480 = vmatpush.msra.mxu0 0.0
        %481 = vmatpush.msra.mxu0 0.0
        %482 = vmatpush.msra.mxu0 0.0
        %483 = vmatpush.msra.mxu0 %v424
        %484 = vmatmul.f32.gmra.mxu0 %v418
        %v485 = vpop.f32.mrf.mxu0
        %v486 = vadd.f32 %v395, %v485
        %487 = vdwg.mxu0
        %488 = vmatpush.msra.mxu0 0.0
        %489 = vmatpush.msra.mxu0 0.0
        %490 = vmatpush.msra.mxu0 0.0
        %491 = vmatpush.msra.mxu0 0.0
        %492 = vmatpush.msra.mxu0 0.0
        %493 = vmatpush.msra.mxu0 0.0
        %494 = vmatpush.msra.mxu0 0.0
        %495 = vmatpush.msra.mxu0 0.0
        %496 = vmatpush.msra.mxu0 0.0
        %497 = vmatpush.msra.mxu0 0.0
        %498 = vmatpush.msra.mxu0 0.0
        %499 = vmatpush.msra.mxu0 0.0
        %500 = vmatpush.msra.mxu0 0.0
        %501 = vmatpush.msra.mxu0 0.0
        %502 = vmatpush.msra.mxu0 0.0
        %503 = vmatpush.msra.mxu0 %v426
        %504 = vmatmul.f32.gmra.mxu0 %v418
        %v505 = vpop.f32.mrf.mxu0
        %v506 = vadd.f32 %v415, %v505
        %507 = vdwg.mxu0
        %s508 = scalar_lea.vmem %s0, 16
        %v509 = vld [vmem:[%s508] sm:$0xff]
        %510 = vrot.lane.b32.xlu0 %v296, 126
        %v511 = vpop.permute.xlu0 %510
        %512 = vrot.lane.b32.xlu0 %v297, 126
        %v513 = vpop.permute.xlu0 %512
        %514 = vrot.lane.b32.xlu0 %v298, 126
        %v515 = vpop.permute.xlu0 %514
        %516 = vrot.lane.b32.xlu0 %v299, 126
        %v517 = vpop.permute.xlu0 %516
        %518 = vrot.lane.b32.xlu0 %v305, 126
        %v519 = vpop.permute.xlu0 %518
        %vm520 = vcmask 1031168
        %v521 = vsel %vm520, %v511, %v513
        %v522 = vsel %vm520, %v513, %v515
        %v523 = vsel %vm520, %v515, %v517
        %v524 = vsel %vm520, %v517, %v519
        %v526 = vsel %vm324, %v509, 0
        %v528 = vsel %vm328, %v521, 0
        %v530 = vsel %vm328, %v522, 0
        %v532 = vsel %vm328, %v523, 0
        %v534 = vsel %vm328, %v524, 0
        %536 = vmatpush.msra.mxu0 0.0
        %537 = vmatpush.msra.mxu0 0.0
        %538 = vmatpush.msra.mxu0 0.0
        %539 = vmatpush.msra.mxu0 0.0
        %540 = vmatpush.msra.mxu0 0.0
        %541 = vmatpush.msra.mxu0 0.0
        %542 = vmatpush.msra.mxu0 0.0
        %543 = vmatpush.msra.mxu0 0.0
        %544 = vmatpush.msra.mxu0 0.0
        %545 = vmatpush.msra.mxu0 0.0
        %546 = vmatpush.msra.mxu0 0.0
        %547 = vmatpush.msra.mxu0 0.0
        %548 = vmatpush.msra.mxu0 0.0
        %549 = vmatpush.msra.mxu0 0.0
        %550 = vmatpush.msra.mxu0 0.0
        %551 = vmatpush.msra.mxu0 %v528
        %552 = vmatmul.f32.gmra.mxu0 %v526
        %v553 = vpop.f32.mrf.mxu0
        %v554 = vadd.f32 0.0, %v553
        %555 = vdwg.mxu0
        %556 = vmatpush.msra.mxu0 0.0
        %557 = vmatpush.msra.mxu0 0.0
        %558 = vmatpush.msra.mxu0 0.0
        %559 = vmatpush.msra.mxu0 0.0
        %560 = vmatpush.msra.mxu0 0.0
        %561 = vmatpush.msra.mxu0 0.0
        %562 = vmatpush.msra.mxu0 0.0
        %563 = vmatpush.msra.mxu0 0.0
        %564 = vmatpush.msra.mxu0 0.0
        %565 = vmatpush.msra.mxu0 0.0
        %566 = vmatpush.msra.mxu0 0.0
        %567 = vmatpush.msra.mxu0 0.0
        %568 = vmatpush.msra.mxu0 0.0
        %569 = vmatpush.msra.mxu0 0.0
        %570 = vmatpush.msra.mxu0 0.0
        %571 = vmatpush.msra.mxu0 %v530
        %572 = vmatmul.f32.gmra.mxu0 %v526
        %v573 = vpop.f32.mrf.mxu0
        %v574 = vadd.f32 0.0, %v573
        %575 = vdwg.mxu0
        %576 = vmatpush.msra.mxu0 0.0
        %577 = vmatpush.msra.mxu0 0.0
        %578 = vmatpush.msra.mxu0 0.0
        %579 = vmatpush.msra.mxu0 0.0
        %580 = vmatpush.msra.mxu0 0.0
        %581 = vmatpush.msra.mxu0 0.0
        %582 = vmatpush.msra.mxu0 0.0
        %583 = vmatpush.msra.mxu0 0.0
        %584 = vmatpush.msra.mxu0 0.0
        %585 = vmatpush.msra.mxu0 0.0
        %586 = vmatpush.msra.mxu0 0.0
        %587 = vmatpush.msra.mxu0 0.0
        %588 = vmatpush.msra.mxu0 0.0
        %589 = vmatpush.msra.mxu0 0.0
        %590 = vmatpush.msra.mxu0 0.0
        %591 = vmatpush.msra.mxu0 %v532
        %592 = vmatmul.f32.gmra.mxu0 %v526
        %v593 = vpop.f32.mrf.mxu0
        %v594 = vadd.f32 0.0, %v593
        %595 = vdwg.mxu0
        %596 = vmatpush.msra.mxu0 0.0
        %597 = vmatpush.msra.mxu0 0.0
        %598 = vmatpush.msra.mxu0 0.0
        %599 = vmatpush.msra.mxu0 0.0
        %600 = vmatpush.msra.mxu0 0.0
        %601 = vmatpush.msra.mxu0 0.0
        %602 = vmatpush.msra.mxu0 0.0
        %603 = vmatpush.msra.mxu0 0.0
        %604 = vmatpush.msra.mxu0 0.0
        %605 = vmatpush.msra.mxu0 0.0
        %606 = vmatpush.msra.mxu0 0.0
        %607 = vmatpush.msra.mxu0 0.0
        %608 = vmatpush.msra.mxu0 0.0
        %609 = vmatpush.msra.mxu0 0.0
        %610 = vmatpush.msra.mxu0 0.0
        %611 = vmatpush.msra.mxu0 %v534
        %612 = vmatmul.f32.gmra.mxu0 %v526
        %v613 = vpop.f32.mrf.mxu0
        %v614 = vadd.f32 0.0, %v613
        %615 = vdwg.mxu0
        %v616 = vadd.f32 %v446, %v554
        %v617 = vadd.f32 %v466, %v574
        %v618 = vadd.f32 %v486, %v594
        %v619 = vadd.f32 %v506, %v614
        %s620 = scalar_lea.vmem %s0, 24
        %v621 = vld [vmem:[%s620] sm:$0xff]
        %622 = vrot.lane.b32.xlu0 %v296, 110
        %v623 = vpop.permute.xlu0 %622
        %624 = vrot.lane.b32.xlu0 %v297, 110
        %v625 = vpop.permute.xlu0 %624
        %626 = vrot.lane.b32.xlu0 %v298, 110
        %v627 = vpop.permute.xlu0 %626
        %628 = vrot.lane.b32.xlu0 %v299, 110
        %v629 = vpop.permute.xlu0 %628
        %630 = vrot.lane.b32.xlu0 %v305, 110
        %v631 = vpop.permute.xlu0 %630
        %vm632 = vcmask 900096
        %v633 = vsel %vm632, %v623, %v625
        %v634 = vsel %vm632, %v625, %v627
        %v635 = vsel %vm632, %v627, %v629
        %v636 = vsel %vm632, %v629, %v631
        %v638 = vsel %vm324, %v621, 0
        %v640 = vsel %vm328, %v633, 0
        %v642 = vsel %vm328, %v634, 0
        %v644 = vsel %vm328, %v635, 0
        %v646 = vsel %vm328, %v636, 0
        %648 = vmatpush.msra.mxu0 0.0
        %649 = vmatpush.msra.mxu0 0.0
        %650 = vmatpush.msra.mxu0 0.0
        %651 = vmatpush.msra.mxu0 0.0
        %652 = vmatpush.msra.mxu0 0.0
        %653 = vmatpush.msra.mxu0 0.0
        %654 = vmatpush.msra.mxu0 0.0
        %655 = vmatpush.msra.mxu0 0.0
        %656 = vmatpush.msra.mxu0 0.0
        %657 = vmatpush.msra.mxu0 0.0
        %658 = vmatpush.msra.mxu0 0.0
        %659 = vmatpush.msra.mxu0 0.0
        %660 = vmatpush.msra.mxu0 0.0
        %661 = vmatpush.msra.mxu0 0.0
        %662 = vmatpush.msra.mxu0 0.0
        %663 = vmatpush.msra.mxu0 %v640
        %664 = vmatmul.f32.gmra.mxu0 %v638
        %v665 = vpop.f32.mrf.mxu0
        %v666 = vadd.f32 0.0, %v665
        %667 = vdwg.mxu0
        %668 = vmatpush.msra.mxu0 0.0
        %669 = vmatpush.msra.mxu0 0.0
        %670 = vmatpush.msra.mxu0 0.0
        %671 = vmatpush.msra.mxu0 0.0
        %672 = vmatpush.msra.mxu0 0.0
        %673 = vmatpush.msra.mxu0 0.0
        %674 = vmatpush.msra.mxu0 0.0
        %675 = vmatpush.msra.mxu0 0.0
        %676 = vmatpush.msra.mxu0 0.0
        %677 = vmatpush.msra.mxu0 0.0
        %678 = vmatpush.msra.mxu0 0.0
        %679 = vmatpush.msra.mxu0 0.0
        %680 = vmatpush.msra.mxu0 0.0
        %681 = vmatpush.msra.mxu0 0.0
        %682 = vmatpush.msra.mxu0 0.0
        %683 = vmatpush.msra.mxu0 %v642
        %684 = vmatmul.f32.gmra.mxu0 %v638
        %v685 = vpop.f32.mrf.mxu0
        %v686 = vadd.f32 0.0, %v685
        %687 = vdwg.mxu0
        %688 = vmatpush.msra.mxu0 0.0
        %689 = vmatpush.msra.mxu0 0.0
        %690 = vmatpush.msra.mxu0 0.0
        %691 = vmatpush.msra.mxu0 0.0
        %692 = vmatpush.msra.mxu0 0.0
        %693 = vmatpush.msra.mxu0 0.0
        %694 = vmatpush.msra.mxu0 0.0
        %695 = vmatpush.msra.mxu0 0.0
        %696 = vmatpush.msra.mxu0 0.0
        %697 = vmatpush.msra.mxu0 0.0
        %698 = vmatpush.msra.mxu0 0.0
        %699 = vmatpush.msra.mxu0 0.0
        %700 = vmatpush.msra.mxu0 0.0
        %701 = vmatpush.msra.mxu0 0.0
        %702 = vmatpush.msra.mxu0 0.0
        %703 = vmatpush.msra.mxu0 %v644
        %704 = vmatmul.f32.gmra.mxu0 %v638
        %v705 = vpop.f32.mrf.mxu0
        %v706 = vadd.f32 0.0, %v705
        %707 = vdwg.mxu0
        %708 = vmatpush.msra.mxu0 0.0
        %709 = vmatpush.msra.mxu0 0.0
        %710 = vmatpush.msra.mxu0 0.0
        %711 = vmatpush.msra.mxu0 0.0
        %712 = vmatpush.msra.mxu0 0.0
        %713 = vmatpush.msra.mxu0 0.0
        %714 = vmatpush.msra.mxu0 0.0
        %715 = vmatpush.msra.mxu0 0.0
        %716 = vmatpush.msra.mxu0 0.0
        %717 = vmatpush.msra.mxu0 0.0
        %718 = vmatpush.msra.mxu0 0.0
        %719 = vmatpush.msra.mxu0 0.0
        %720 = vmatpush.msra.mxu0 0.0
        %721 = vmatpush.msra.mxu0 0.0
        %722 = vmatpush.msra.mxu0 0.0
        %723 = vmatpush.msra.mxu0 %v646
        %724 = vmatmul.f32.gmra.mxu0 %v638
        %v725 = vpop.f32.mrf.mxu0
        %v726 = vadd.f32 0.0, %v725
        %727 = vdwg.mxu0
        %v728 = vadd.f32 %v616, %v666
        %v729 = vadd.f32 %v617, %v686
        %v730 = vadd.f32 %v618, %v706
        %v731 = vadd.f32 %v619, %v726
        %s732 = scalar_lea.vmem %s0, 32
        %v733 = vld [vmem:[%s732] sm:$0xff]
        %734 = vrot.lane.b32.xlu0 %v296, 109
        %v735 = vpop.permute.xlu0 %734
        %736 = vrot.lane.b32.xlu0 %v297, 109
        %v737 = vpop.permute.xlu0 %736
        %738 = vrot.lane.b32.xlu0 %v298, 109
        %v739 = vpop.permute.xlu0 %738
        %740 = vrot.lane.b32.xlu0 %v299, 109
        %v741 = vpop.permute.xlu0 %740
        %742 = vrot.lane.b32.xlu0 %v305, 109
        %v743 = vpop.permute.xlu0 %742
        %vm744 = vcmask 891904
        %v745 = vsel %vm744, %v735, %v737
        %v746 = vsel %vm744, %v737, %v739
        %v747 = vsel %vm744, %v739, %v741
        %v748 = vsel %vm744, %v741, %v743
        %v750 = vsel %vm324, %v733, 0
        %v752 = vsel %vm328, %v745, 0
        %v754 = vsel %vm328, %v746, 0
        %v756 = vsel %vm328, %v747, 0
        %v758 = vsel %vm328, %v748, 0
        %760 = vmatpush.msra.mxu0 0.0
        %761 = vmatpush.msra.mxu0 0.0
        %762 = vmatpush.msra.mxu0 0.0
        %763 = vmatpush.msra.mxu0 0.0
        %764 = vmatpush.msra.mxu0 0.0
        %765 = vmatpush.msra.mxu0 0.0
        %766 = vmatpush.msra.mxu0 0.0
        %767 = vmatpush.msra.mxu0 0.0
        %768 = vmatpush.msra.mxu0 0.0
        %769 = vmatpush.msra.mxu0 0.0
        %770 = vmatpush.msra.mxu0 0.0
        %771 = vmatpush.msra.mxu0 0.0
        %772 = vmatpush.msra.mxu0 0.0
        %773 = vmatpush.msra.mxu0 0.0
        %774 = vmatpush.msra.mxu0 0.0
        %775 = vmatpush.msra.mxu0 %v752
        %776 = vmatmul.f32.gmra.mxu0 %v750
        %v777 = vpop.f32.mrf.mxu0
        %v778 = vadd.f32 0.0, %v777
        %779 = vdwg.mxu0
        %780 = vmatpush.msra.mxu0 0.0
        %781 = vmatpush.msra.mxu0 0.0
        %782 = vmatpush.msra.mxu0 0.0
        %783 = vmatpush.msra.mxu0 0.0
        %784 = vmatpush.msra.mxu0 0.0
        %785 = vmatpush.msra.mxu0 0.0
        %786 = vmatpush.msra.mxu0 0.0
        %787 = vmatpush.msra.mxu0 0.0
        %788 = vmatpush.msra.mxu0 0.0
        %789 = vmatpush.msra.mxu0 0.0
        %790 = vmatpush.msra.mxu0 0.0
        %791 = vmatpush.msra.mxu0 0.0
        %792 = vmatpush.msra.mxu0 0.0
        %793 = vmatpush.msra.mxu0 0.0
        %794 = vmatpush.msra.mxu0 0.0
        %795 = vmatpush.msra.mxu0 %v754
        %796 = vmatmul.f32.gmra.mxu0 %v750
        %v797 = vpop.f32.mrf.mxu0
        %v798 = vadd.f32 0.0, %v797
        %799 = vdwg.mxu0
        %800 = vmatpush.msra.mxu0 0.0
        %801 = vmatpush.msra.mxu0 0.0
        %802 = vmatpush.msra.mxu0 0.0
        %803 = vmatpush.msra.mxu0 0.0
        %804 = vmatpush.msra.mxu0 0.0
        %805 = vmatpush.msra.mxu0 0.0
        %806 = vmatpush.msra.mxu0 0.0
        %807 = vmatpush.msra.mxu0 0.0
        %808 = vmatpush.msra.mxu0 0.0
        %809 = vmatpush.msra.mxu0 0.0
        %810 = vmatpush.msra.mxu0 0.0
        %811 = vmatpush.msra.mxu0 0.0
        %812 = vmatpush.msra.mxu0 0.0
        %813 = vmatpush.msra.mxu0 0.0
        %814 = vmatpush.msra.mxu0 0.0
        %815 = vmatpush.msra.mxu0 %v756
        %816 = vmatmul.f32.gmra.mxu0 %v750
        %v817 = vpop.f32.mrf.mxu0
        %v818 = vadd.f32 0.0, %v817
        %819 = vdwg.mxu0
        %820 = vmatpush.msra.mxu0 0.0
        %821 = vmatpush.msra.mxu0 0.0
        %822 = vmatpush.msra.mxu0 0.0
        %823 = vmatpush.msra.mxu0 0.0
        %824 = vmatpush.msra.mxu0 0.0
        %825 = vmatpush.msra.mxu0 0.0
        %826 = vmatpush.msra.mxu0 0.0
        %827 = vmatpush.msra.mxu0 0.0
        %828 = vmatpush.msra.mxu0 0.0
        %829 = vmatpush.msra.mxu0 0.0
        %830 = vmatpush.msra.mxu0 0.0
        %831 = vmatpush.msra.mxu0 0.0
        %832 = vmatpush.msra.mxu0 0.0
        %833 = vmatpush.msra.mxu0 0.0
        %834 = vmatpush.msra.mxu0 0.0
        %835 = vmatpush.msra.mxu0 %v758
        %836 = vmatmul.f32.gmra.mxu0 %v750
        %v837 = vpop.f32.mrf.mxu0
        %v838 = vadd.f32 0.0, %v837
        %839 = vdwg.mxu0
        %v840 = vadd.f32 %v728, %v778
        %v841 = vadd.f32 %v729, %v798
        %v842 = vadd.f32 %v730, %v818
        %v843 = vadd.f32 %v731, %v838
        %s844 = scalar_lea.vmem %s0, 40
        %v845 = vld [vmem:[%s844] sm:$0xff]
        %846 = vrot.lane.b32.xlu0 %v296, 108
        %v847 = vpop.permute.xlu0 %846
        %848 = vrot.lane.b32.xlu0 %v297, 108
        %v849 = vpop.permute.xlu0 %848
        %850 = vrot.lane.b32.xlu0 %v298, 108
        %v851 = vpop.permute.xlu0 %850
        %852 = vrot.lane.b32.xlu0 %v299, 108
        %v853 = vpop.permute.xlu0 %852
        %854 = vrot.lane.b32.xlu0 %v305, 108
        %v855 = vpop.permute.xlu0 %854
        %vm856 = vcmask 883712
        %v857 = vsel %vm856, %v847, %v849
        %v858 = vsel %vm856, %v849, %v851
        %v859 = vsel %vm856, %v851, %v853
        %v860 = vsel %vm856, %v853, %v855
        %v862 = vsel %vm324, %v845, 0
        %v864 = vsel %vm328, %v857, 0
        %v866 = vsel %vm328, %v858, 0
        %v868 = vsel %vm328, %v859, 0
        %v870 = vsel %vm328, %v860, 0
        %872 = vmatpush.msra.mxu0 0.0
        %873 = vmatpush.msra.mxu0 0.0
        %874 = vmatpush.msra.mxu0 0.0
        %875 = vmatpush.msra.mxu0 0.0
        %876 = vmatpush.msra.mxu0 0.0
        %877 = vmatpush.msra.mxu0 0.0
        %878 = vmatpush.msra.mxu0 0.0
        %879 = vmatpush.msra.mxu0 0.0
        %880 = vmatpush.msra.mxu0 0.0
        %881 = vmatpush.msra.mxu0 0.0
        %882 = vmatpush.msra.mxu0 0.0
        %883 = vmatpush.msra.mxu0 0.0
        %884 = vmatpush.msra.mxu0 0.0
        %885 = vmatpush.msra.mxu0 0.0
        %886 = vmatpush.msra.mxu0 0.0
        %887 = vmatpush.msra.mxu0 %v864
        %888 = vmatmul.f32.gmra.mxu0 %v862
        %v889 = vpop.f32.mrf.mxu0
        %v890 = vadd.f32 0.0, %v889
        %891 = vdwg.mxu0
        %892 = vmatpush.msra.mxu0 0.0
        %893 = vmatpush.msra.mxu0 0.0
        %894 = vmatpush.msra.mxu0 0.0
        %895 = vmatpush.msra.mxu0 0.0
        %896 = vmatpush.msra.mxu0 0.0
        %897 = vmatpush.msra.mxu0 0.0
        %898 = vmatpush.msra.mxu0 0.0
        %899 = vmatpush.msra.mxu0 0.0
        %900 = vmatpush.msra.mxu0 0.0
        %901 = vmatpush.msra.mxu0 0.0
        %902 = vmatpush.msra.mxu0 0.0
        %903 = vmatpush.msra.mxu0 0.0
        %904 = vmatpush.msra.mxu0 0.0
        %905 = vmatpush.msra.mxu0 0.0
        %906 = vmatpush.msra.mxu0 0.0
        %907 = vmatpush.msra.mxu0 %v866
        %908 = vmatmul.f32.gmra.mxu0 %v862
        %v909 = vpop.f32.mrf.mxu0
        %v910 = vadd.f32 0.0, %v909
        %911 = vdwg.mxu0
        %912 = vmatpush.msra.mxu0 0.0
        %913 = vmatpush.msra.mxu0 0.0
        %914 = vmatpush.msra.mxu0 0.0
        %915 = vmatpush.msra.mxu0 0.0
        %916 = vmatpush.msra.mxu0 0.0
        %917 = vmatpush.msra.mxu0 0.0
        %918 = vmatpush.msra.mxu0 0.0
        %919 = vmatpush.msra.mxu0 0.0
        %920 = vmatpush.msra.mxu0 0.0
        %921 = vmatpush.msra.mxu0 0.0
        %922 = vmatpush.msra.mxu0 0.0
        %923 = vmatpush.msra.mxu0 0.0
        %924 = vmatpush.msra.mxu0 0.0
        %925 = vmatpush.msra.mxu0 0.0
        %926 = vmatpush.msra.mxu0 0.0
        %927 = vmatpush.msra.mxu0 %v868
        %928 = vmatmul.f32.gmra.mxu0 %v862
        %v929 = vpop.f32.mrf.mxu0
        %v930 = vadd.f32 0.0, %v929
        %931 = vdwg.mxu0
        %932 = vmatpush.msra.mxu0 0.0
        %933 = vmatpush.msra.mxu0 0.0
        %934 = vmatpush.msra.mxu0 0.0
        %935 = vmatpush.msra.mxu0 0.0
        %936 = vmatpush.msra.mxu0 0.0
        %937 = vmatpush.msra.mxu0 0.0
        %938 = vmatpush.msra.mxu0 0.0
        %939 = vmatpush.msra.mxu0 0.0
        %940 = vmatpush.msra.mxu0 0.0
        %941 = vmatpush.msra.mxu0 0.0
        %942 = vmatpush.msra.mxu0 0.0
        %943 = vmatpush.msra.mxu0 0.0
        %944 = vmatpush.msra.mxu0 0.0
        %945 = vmatpush.msra.mxu0 0.0
        %946 = vmatpush.msra.mxu0 0.0
        %947 = vmatpush.msra.mxu0 %v870
        %948 = vmatmul.f32.gmra.mxu0 %v862
        %v949 = vpop.f32.mrf.mxu0
        %v950 = vadd.f32 0.0, %v949
        %951 = vdwg.mxu0
        %v952 = vadd.f32 %v840, %v890
        %v953 = vadd.f32 %v841, %v910
        %v954 = vadd.f32 %v842, %v930
        %v955 = vadd.f32 %v843, %v950
        %s956 = scalar_lea.vmem %s0, 48
        %v957 = vld [vmem:[%s956] sm:$0xff]
        %958 = vrot.lane.b32.xlu0 %v296, 92
        %v959 = vpop.permute.xlu0 %958
        %960 = vrot.lane.b32.xlu0 %v297, 92
        %v961 = vpop.permute.xlu0 %960
        %962 = vrot.lane.b32.xlu0 %v298, 92
        %v963 = vpop.permute.xlu0 %962
        %964 = vrot.lane.b32.xlu0 %v299, 92
        %v965 = vpop.permute.xlu0 %964
        %966 = vrot.lane.b32.xlu0 %v305, 92
        %v967 = vpop.permute.xlu0 %966
        %vm968 = vcmask 752640
        %v969 = vsel %vm968, %v959, %v961
        %v970 = vsel %vm968, %v961, %v963
        %v971 = vsel %vm968, %v963, %v965
        %v972 = vsel %vm968, %v965, %v967
        %v974 = vsel %vm324, %v957, 0
        %v976 = vsel %vm328, %v969, 0
        %v978 = vsel %vm328, %v970, 0
        %v980 = vsel %vm328, %v971, 0
        %v982 = vsel %vm328, %v972, 0
        %984 = vmatpush.msra.mxu0 0.0
        %985 = vmatpush.msra.mxu0 0.0
        %986 = vmatpush.msra.mxu0 0.0
        %987 = vmatpush.msra.mxu0 0.0
        %988 = vmatpush.msra.mxu0 0.0
        %989 = vmatpush.msra.mxu0 0.0
        %990 = vmatpush.msra.mxu0 0.0
        %991 = vmatpush.msra.mxu0 0.0
        %992 = vmatpush.msra.mxu0 0.0
        %993 = vmatpush.msra.mxu0 0.0
        %994 = vmatpush.msra.mxu0 0.0
        %995 = vmatpush.msra.mxu0 0.0
        %996 = vmatpush.msra.mxu0 0.0
        %997 = vmatpush.msra.mxu0 0.0
        %998 = vmatpush.msra.mxu0 0.0
        %999 = vmatpush.msra.mxu0 %v976
        %1000 = vmatmul.f32.gmra.mxu0 %v974
        %v1001 = vpop.f32.mrf.mxu0
        %v1002 = vadd.f32 0.0, %v1001
        %1003 = vdwg.mxu0
        %1004 = vmatpush.msra.mxu0 0.0
        %1005 = vmatpush.msra.mxu0 0.0
        %1006 = vmatpush.msra.mxu0 0.0
        %1007 = vmatpush.msra.mxu0 0.0
        %1008 = vmatpush.msra.mxu0 0.0
        %1009 = vmatpush.msra.mxu0 0.0
        %1010 = vmatpush.msra.mxu0 0.0
        %1011 = vmatpush.msra.mxu0 0.0
        %1012 = vmatpush.msra.mxu0 0.0
        %1013 = vmatpush.msra.mxu0 0.0
        %1014 = vmatpush.msra.mxu0 0.0
        %1015 = vmatpush.msra.mxu0 0.0
        %1016 = vmatpush.msra.mxu0 0.0
        %1017 = vmatpush.msra.mxu0 0.0
        %1018 = vmatpush.msra.mxu0 0.0
        %1019 = vmatpush.msra.mxu0 %v978
        %1020 = vmatmul.f32.gmra.mxu0 %v974
        %v1021 = vpop.f32.mrf.mxu0
        %v1022 = vadd.f32 0.0, %v1021
        %1023 = vdwg.mxu0
        %1024 = vmatpush.msra.mxu0 0.0
        %1025 = vmatpush.msra.mxu0 0.0
        %1026 = vmatpush.msra.mxu0 0.0
        %1027 = vmatpush.msra.mxu0 0.0
        %1028 = vmatpush.msra.mxu0 0.0
        %1029 = vmatpush.msra.mxu0 0.0
        %1030 = vmatpush.msra.mxu0 0.0
        %1031 = vmatpush.msra.mxu0 0.0
        %1032 = vmatpush.msra.mxu0 0.0
        %1033 = vmatpush.msra.mxu0 0.0
        %1034 = vmatpush.msra.mxu0 0.0
        %1035 = vmatpush.msra.mxu0 0.0
        %1036 = vmatpush.msra.mxu0 0.0
        %1037 = vmatpush.msra.mxu0 0.0
        %1038 = vmatpush.msra.mxu0 0.0
        %1039 = vmatpush.msra.mxu0 %v980
        %1040 = vmatmul.f32.gmra.mxu0 %v974
        %v1041 = vpop.f32.mrf.mxu0
        %v1042 = vadd.f32 0.0, %v1041
        %1043 = vdwg.mxu0
        %1044 = vmatpush.msra.mxu0 0.0
        %1045 = vmatpush.msra.mxu0 0.0
        %1046 = vmatpush.msra.mxu0 0.0
        %1047 = vmatpush.msra.mxu0 0.0
        %1048 = vmatpush.msra.mxu0 0.0
        %1049 = vmatpush.msra.mxu0 0.0
        %1050 = vmatpush.msra.mxu0 0.0
        %1051 = vmatpush.msra.mxu0 0.0
        %1052 = vmatpush.msra.mxu0 0.0
        %1053 = vmatpush.msra.mxu0 0.0
        %1054 = vmatpush.msra.mxu0 0.0
        %1055 = vmatpush.msra.mxu0 0.0
        %1056 = vmatpush.msra.mxu0 0.0
        %1057 = vmatpush.msra.mxu0 0.0
        %1058 = vmatpush.msra.mxu0 0.0
        %1059 = vmatpush.msra.mxu0 %v982
        %1060 = vmatmul.f32.gmra.mxu0 %v974
        %v1061 = vpop.f32.mrf.mxu0
        %v1062 = vadd.f32 0.0, %v1061
        %1063 = vdwg.mxu0
        %v1064 = vadd.f32 %v952, %v1002
        %v1065 = vadd.f32 %v953, %v1022
        %v1066 = vadd.f32 %v954, %v1042
        %v1067 = vadd.f32 %v955, %v1062
        %s1068 = scalar_lea.vmem %s0, 56
        %v1069 = vld [vmem:[%s1068] sm:$0xff]
        %1070 = vrot.lane.b32.xlu0 %v296, 91
        %v1071 = vpop.permute.xlu0 %1070
        %1072 = vrot.lane.b32.xlu0 %v297, 91
        %v1073 = vpop.permute.xlu0 %1072
        %1074 = vrot.lane.b32.xlu0 %v298, 91
        %v1075 = vpop.permute.xlu0 %1074
        %1076 = vrot.lane.b32.xlu0 %v299, 91
        %v1077 = vpop.permute.xlu0 %1076
        %1078 = vrot.lane.b32.xlu0 %v305, 91
        %v1079 = vpop.permute.xlu0 %1078
        %vm1080 = vcmask 744448
        %v1081 = vsel %vm1080, %v1071, %v1073
        %v1082 = vsel %vm1080, %v1073, %v1075
        %v1083 = vsel %vm1080, %v1075, %v1077
        %v1084 = vsel %vm1080, %v1077, %v1079
        %v1086 = vsel %vm324, %v1069, 0
        %v1088 = vsel %vm328, %v1081, 0
        %v1090 = vsel %vm328, %v1082, 0
        %v1092 = vsel %vm328, %v1083, 0
        %v1094 = vsel %vm328, %v1084, 0
        %1096 = vmatpush.msra.mxu0 0.0
        %1097 = vmatpush.msra.mxu0 0.0
        %1098 = vmatpush.msra.mxu0 0.0
        %1099 = vmatpush.msra.mxu0 0.0
        %1100 = vmatpush.msra.mxu0 0.0
        %1101 = vmatpush.msra.mxu0 0.0
        %1102 = vmatpush.msra.mxu0 0.0
        %1103 = vmatpush.msra.mxu0 0.0
        %1104 = vmatpush.msra.mxu0 0.0
        %1105 = vmatpush.msra.mxu0 0.0
        %1106 = vmatpush.msra.mxu0 0.0
        %1107 = vmatpush.msra.mxu0 0.0
        %1108 = vmatpush.msra.mxu0 0.0
        %1109 = vmatpush.msra.mxu0 0.0
        %1110 = vmatpush.msra.mxu0 0.0
        %1111 = vmatpush.msra.mxu0 %v1088
        %1112 = vmatmul.f32.gmra.mxu0 %v1086
        %v1113 = vpop.f32.mrf.mxu0
        %v1114 = vadd.f32 0.0, %v1113
        %1115 = vdwg.mxu0
        %1116 = vmatpush.msra.mxu0 0.0
        %1117 = vmatpush.msra.mxu0 0.0
        %1118 = vmatpush.msra.mxu0 0.0
        %1119 = vmatpush.msra.mxu0 0.0
        %1120 = vmatpush.msra.mxu0 0.0
        %1121 = vmatpush.msra.mxu0 0.0
        %1122 = vmatpush.msra.mxu0 0.0
        %1123 = vmatpush.msra.mxu0 0.0
        %1124 = vmatpush.msra.mxu0 0.0
        %1125 = vmatpush.msra.mxu0 0.0
        %1126 = vmatpush.msra.mxu0 0.0
        %1127 = vmatpush.msra.mxu0 0.0
        %1128 = vmatpush.msra.mxu0 0.0
        %1129 = vmatpush.msra.mxu0 0.0
        %1130 = vmatpush.msra.mxu0 0.0
        %1131 = vmatpush.msra.mxu0 %v1090
        %1132 = vmatmul.f32.gmra.mxu0 %v1086
        %v1133 = vpop.f32.mrf.mxu0
        %v1134 = vadd.f32 0.0, %v1133
        %1135 = vdwg.mxu0
        %1136 = vmatpush.msra.mxu0 0.0
        %1137 = vmatpush.msra.mxu0 0.0
        %1138 = vmatpush.msra.mxu0 0.0
        %1139 = vmatpush.msra.mxu0 0.0
        %1140 = vmatpush.msra.mxu0 0.0
        %1141 = vmatpush.msra.mxu0 0.0
        %1142 = vmatpush.msra.mxu0 0.0
        %1143 = vmatpush.msra.mxu0 0.0
        %1144 = vmatpush.msra.mxu0 0.0
        %1145 = vmatpush.msra.mxu0 0.0
        %1146 = vmatpush.msra.mxu0 0.0
        %1147 = vmatpush.msra.mxu0 0.0
        %1148 = vmatpush.msra.mxu0 0.0
        %1149 = vmatpush.msra.mxu0 0.0
        %1150 = vmatpush.msra.mxu0 0.0
        %1151 = vmatpush.msra.mxu0 %v1092
        %1152 = vmatmul.f32.gmra.mxu0 %v1086
        %v1153 = vpop.f32.mrf.mxu0
        %v1154 = vadd.f32 0.0, %v1153
        %1155 = vdwg.mxu0
        %1156 = vmatpush.msra.mxu0 0.0
        %1157 = vmatpush.msra.mxu0 0.0
        %1158 = vmatpush.msra.mxu0 0.0
        %1159 = vmatpush.msra.mxu0 0.0
        %1160 = vmatpush.msra.mxu0 0.0
        %1161 = vmatpush.msra.mxu0 0.0
        %1162 = vmatpush.msra.mxu0 0.0
        %1163 = vmatpush.msra.mxu0 0.0
        %1164 = vmatpush.msra.mxu0 0.0
        %1165 = vmatpush.msra.mxu0 0.0
        %1166 = vmatpush.msra.mxu0 0.0
        %1167 = vmatpush.msra.mxu0 0.0
        %1168 = vmatpush.msra.mxu0 0.0
        %1169 = vmatpush.msra.mxu0 0.0
        %1170 = vmatpush.msra.mxu0 0.0
        %1171 = vmatpush.msra.mxu0 %v1094
        %1172 = vmatmul.f32.gmra.mxu0 %v1086
        %v1173 = vpop.f32.mrf.mxu0
        %v1174 = vadd.f32 0.0, %v1173
        %1175 = vdwg.mxu0
        %v1176 = vadd.f32 %v1064, %v1114
        %v1177 = vadd.f32 %v1065, %v1134
        %v1178 = vadd.f32 %v1066, %v1154
        %v1179 = vadd.f32 %v1067, %v1174
        %s1180 = scalar_lea.vmem %s0, 64
        %v1181 = vld [vmem:[%s1180] sm:$0xff]
        %1182 = vrot.lane.b32.xlu0 %v296, 90
        %v1183 = vpop.permute.xlu0 %1182
        %1184 = vrot.lane.b32.xlu0 %v297, 90
        %v1185 = vpop.permute.xlu0 %1184
        %1186 = vrot.lane.b32.xlu0 %v298, 90
        %v1187 = vpop.permute.xlu0 %1186
        %1188 = vrot.lane.b32.xlu0 %v299, 90
        %v1189 = vpop.permute.xlu0 %1188
        %1190 = vrot.lane.b32.xlu0 %v305, 90
        %v1191 = vpop.permute.xlu0 %1190
        %vm1192 = vcmask 736256
        %v1193 = vsel %vm1192, %v1183, %v1185
        %v1194 = vsel %vm1192, %v1185, %v1187
        %v1195 = vsel %vm1192, %v1187, %v1189
        %v1196 = vsel %vm1192, %v1189, %v1191
        %v1198 = vsel %vm324, %v1181, 0
        %v1200 = vsel %vm328, %v1193, 0
        %v1202 = vsel %vm328, %v1194, 0
        %v1204 = vsel %vm328, %v1195, 0
        %v1206 = vsel %vm328, %v1196, 0
        %1208 = vmatpush.msra.mxu0 0.0
        %1209 = vmatpush.msra.mxu0 0.0
        %1210 = vmatpush.msra.mxu0 0.0
        %1211 = vmatpush.msra.mxu0 0.0
        %1212 = vmatpush.msra.mxu0 0.0
        %1213 = vmatpush.msra.mxu0 0.0
        %1214 = vmatpush.msra.mxu0 0.0
        %1215 = vmatpush.msra.mxu0 0.0
        %1216 = vmatpush.msra.mxu0 0.0
        %1217 = vmatpush.msra.mxu0 0.0
        %1218 = vmatpush.msra.mxu0 0.0
        %1219 = vmatpush.msra.mxu0 0.0
        %1220 = vmatpush.msra.mxu0 0.0
        %1221 = vmatpush.msra.mxu0 0.0
        %1222 = vmatpush.msra.mxu0 0.0
        %1223 = vmatpush.msra.mxu0 %v1200
        %1224 = vmatmul.f32.gmra.mxu0 %v1198
        %v1225 = vpop.f32.mrf.mxu0
        %v1226 = vadd.f32 0.0, %v1225
        %1227 = vdwg.mxu0
        %1228 = vmatpush.msra.mxu0 0.0
        %1229 = vmatpush.msra.mxu0 0.0
        %1230 = vmatpush.msra.mxu0 0.0
        %1231 = vmatpush.msra.mxu0 0.0
        %1232 = vmatpush.msra.mxu0 0.0
        %1233 = vmatpush.msra.mxu0 0.0
        %1234 = vmatpush.msra.mxu0 0.0
        %1235 = vmatpush.msra.mxu0 0.0
        %1236 = vmatpush.msra.mxu0 0.0
        %1237 = vmatpush.msra.mxu0 0.0
        %1238 = vmatpush.msra.mxu0 0.0
        %1239 = vmatpush.msra.mxu0 0.0
        %1240 = vmatpush.msra.mxu0 0.0
        %1241 = vmatpush.msra.mxu0 0.0
        %1242 = vmatpush.msra.mxu0 0.0
        %1243 = vmatpush.msra.mxu0 %v1202
        %1244 = vmatmul.f32.gmra.mxu0 %v1198
        %v1245 = vpop.f32.mrf.mxu0
        %v1246 = vadd.f32 0.0, %v1245
        %1247 = vdwg.mxu0
        %1248 = vmatpush.msra.mxu0 0.0
        %1249 = vmatpush.msra.mxu0 0.0
        %1250 = vmatpush.msra.mxu0 0.0
        %1251 = vmatpush.msra.mxu0 0.0
        %1252 = vmatpush.msra.mxu0 0.0
        %1253 = vmatpush.msra.mxu0 0.0
        %1254 = vmatpush.msra.mxu0 0.0
        %1255 = vmatpush.msra.mxu0 0.0
        %1256 = vmatpush.msra.mxu0 0.0
        %1257 = vmatpush.msra.mxu0 0.0
        %1258 = vmatpush.msra.mxu0 0.0
        %1259 = vmatpush.msra.mxu0 0.0
        %1260 = vmatpush.msra.mxu0 0.0
        %1261 = vmatpush.msra.mxu0 0.0
        %1262 = vmatpush.msra.mxu0 0.0
        %1263 = vmatpush.msra.mxu0 %v1204
        %1264 = vmatmul.f32.gmra.mxu0 %v1198
        %v1265 = vpop.f32.mrf.mxu0
        %v1266 = vadd.f32 0.0, %v1265
        %1267 = vdwg.mxu0
        %1268 = vmatpush.msra.mxu0 0.0
        %1269 = vmatpush.msra.mxu0 0.0
        %1270 = vmatpush.msra.mxu0 0.0
        %1271 = vmatpush.msra.mxu0 0.0
        %1272 = vmatpush.msra.mxu0 0.0
        %1273 = vmatpush.msra.mxu0 0.0
        %1274 = vmatpush.msra.mxu0 0.0
        %1275 = vmatpush.msra.mxu0 0.0
        %1276 = vmatpush.msra.mxu0 0.0
        %1277 = vmatpush.msra.mxu0 0.0
        %1278 = vmatpush.msra.mxu0 0.0
        %1279 = vmatpush.msra.mxu0 0.0
        %1280 = vmatpush.msra.mxu0 0.0
        %1281 = vmatpush.msra.mxu0 0.0
        %1282 = vmatpush.msra.mxu0 0.0
        %1283 = vmatpush.msra.mxu0 %v1206
        %1284 = vmatmul.f32.gmra.mxu0 %v1198
        %v1285 = vpop.f32.mrf.mxu0
        %v1286 = vadd.f32 0.0, %v1285
        %1287 = vdwg.mxu0
        %v1288 = vadd.f32 %v1176, %v1226
        %v1289 = vadd.f32 %v1177, %v1246
        %v1290 = vadd.f32 %v1178, %v1266
        %v1291 = vadd.f32 %v1179, %v1286
        %1292 = vst [vmem:[%s254] sm:$0xff] %v1288
        %1293 = vst [vmem:[%s254 + $0x8] sm:$0xff] %v1289
        %1294 = vst [vmem:[%s254 + $0x10] sm:$0xff] %v1290
        %1295 = vst [vmem:[%s254 + $0x18] sm:$0xff] %v1291
        %v1296 = vld [vmem:[%s279] sm:$0xf]
        %v1298 = vperm.slane %v1296, 0
        %v1299 = vperm.slane %v1296, 1
        %v1300 = vperm.slane %v1296, 2
        %v1301 = vperm.slane %v1296, 3
        %v1306 = vmul.f32 %v1288, %v1298
        %v1307 = vmul.f32 %v1289, %v1299
        %v1308 = vmul.f32 %v1290, %v1300
        %v1309 = vmul.f32 %v1291, %v1301
        %v1310 = vadd.f32 %v1306, %v1307
        %v1311 = vadd.f32 %v1310, %v1308
        %v1312 = vadd.f32 %v1311, %v1309
        %1313 = vadd.xlane.f32.xlu0 %v1312
        %v1314 = vpop.xlane.xlu0 %1313
        %vm1315 = vcmask 7168
        %1316 = vst.msk [vmem:[%s286] sm:$0xff] %vm1315, %v1314
        %v1317 = vmul.f32 %v1306, %v1288
        %v1318 = vmul.f32 %v1307, %v1289
        %v1319 = vmul.f32 %v1308, %v1290
        %v1320 = vmul.f32 %v1309, %v1291
        %v1321 = vadd.f32 %v1317, %v1318
        %v1322 = vadd.f32 %v1321, %v1319
        %v1323 = vadd.f32 %v1322, %v1320
        %1324 = vadd.xlane.f32.xlu0 %v1323
        %v1325 = vpop.xlane.xlu0 %1324
        %s1326 = scalar_lea.vmem %s286, 8
        %1327 = vst.msk [vmem:[%s1326] sm:$0xff] %vm1315, %v1325
        %s1328 = sand.u32 %s129, 1
        %s1329 = scalar_lea.sflag [#allocation3], %s1328
        %s1330 = sand.u32 %s129, 1
        %s1331 = smul.addr %s1330, 32
        %s1332 = scalar_lea.vmem [#allocation2], %s1331
        %p1333 = scmp.lt.s32.totalorder %s20, 1
        %s1334 = scalar_select %p1333, %s20, 1
        %s1335 = smul.addr %s1334, 2
        %s1336 = smul.addr %s1335, 8
        %s1337 = scalar_lea.vmem %s5, %s1336
        // Predicated region
        $region37: #{tpu_custom_call.1} parent=35 // pred_check
          %p1338 = pneg %p139
        $region38: #{tpu_custom_call.1} parent=35 // pred_check_branch
          %1340 = sbr.rel (%p1338) target = $region40
        $region39: #{tpu_custom_call.1} parent=35 // pred_region
          %s1341 = smul.u32 4, %s20
          %1343 = vsyncadd %s1329, 0
          %s1344 = smul.addr %s1341, 8
          %s1345 = scalar_lea.hbm %s4, %s1344
          %s1347 = sshll.u32 %s1332, 4
          %s1348 = int_to_ptr.vmem [resolvable:$true] %s1347
          %s1349 = sshll.u32 %s1345, 4
          %s1350 = int_to_ptr.hbm [resolvable:$true] %s1349
          %1352 = dma.vmem_to_hbm [thread:$0]  %s1348, 512, %s1350, %s1329
        $region40: #{tpu_custom_call.1} parent=35 // pred_fallthru
          _
        // Predicated region
        $region41: #{tpu_custom_call.1} parent=35 // pred_check
          %p1353 = pneg %p165
        $region42: #{tpu_custom_call.1} parent=35 // pred_check_branch
          %1355 = sbr.rel (%p1353) target = $region44
        $region43: #{tpu_custom_call.1} parent=35 // pred_region
          _
        $region44: #{tpu_custom_call.1} parent=35 // pred_fallthru
          _
      $region36: #{tpu_custom_call.1} parent=5 // pred_fallthru
        _
      %p1356 = scmp.le.s32.totalorder 2, %s15
      // Predicated region
      $region45: #{tpu_custom_call.1} parent=5 // pred_check
        %p1357 = pneg %p1356
      $region46: #{tpu_custom_call.1} parent=5 // pred_check_branch
        %1359 = sbr.rel (%p1357) target = $region48
      $region47: #{tpu_custom_call.1} parent=5 // pred_region
        %s1360 = ssub.s32 %s15, 2
        // Predicated region
        $region49: #{tpu_custom_call.1} parent=47 // pred_check
          %p1361 = pneg %p145
        $region50: #{tpu_custom_call.1} parent=47 // pred_check_branch
          %1363 = sbr.rel (%p1361) target = $region52
        $region51: #{tpu_custom_call.1} parent=47 // pred_region
          %s1364 = sand.u32 %s130, 1
          %s1365 = scalar_lea.sflag [#allocation3], %s1364
          %s1366 = sand.u32 %s130, 1
          %s1367 = smul.addr %s1366, 32
          %s1368 = scalar_lea.vmem [#allocation2], %s1367
          %1370 = dma.done %s1365, 512
        $region52: #{tpu_custom_call.1} parent=47 // pred_fallthru
          _
        // Predicated region
        $region53: #{tpu_custom_call.1} parent=47 // pred_check
          %p1371 = pneg %p171
        $region54: #{tpu_custom_call.1} parent=47 // pred_check_branch
          %1373 = sbr.rel (%p1371) target = $region56
        $region55: #{tpu_custom_call.1} parent=47 // pred_region
          %p1374 = scmp.lt.s32.totalorder %s21, 1
          %s1375 = scalar_select %p1374, %s21, 1
          %s1376 = smul.addr %s1375, 2
          %s1377 = smul.addr %s1376, 8
          %s1378 = scalar_lea.vmem %s5, %s1377
        $region56: #{tpu_custom_call.1} parent=47 // pred_fallthru
          _
      $region48: #{tpu_custom_call.1} parent=5 // pred_fallthru
        _
    $region6: #{tpu_custom_call.1} parent=1 // loop_footer
      %s19 = sadd.s32 1, %s15
    $region7: #{tpu_custom_call.1} parent=1 // loop_footer_branch
      %14 = sbr.rel target = $region3
    $region8: #{tpu_custom_call.1} parent=1 // loop_exit
      _
    %1379 = vsyncpa [#allocation3], 1
    %s1380 = scalar_lea.sflag [#allocation3], 1
    %1381 = vsyncpa %s1380, 1

</llo_original>
